<compile_context>
chip_gen: v6e
topology: v6e:2x2x1
jax: 0.10.0
libtpu: 0.0.40
codegen_flags: <defaults>
</compile_context>

<pallas_src>
import jax
import jax.numpy as jnp
from jax.experimental import pallas as pl
from jax.experimental.pallas import tpu as pltpu


# --------------------------------------------------------------------------
# Pallas kernel: one grid step per image; everything lane-dense in VMEM.
# --------------------------------------------------------------------------
def _fuse_kernel(xh_ref, xl_ref,
                 w_fh_ref, b_fh_ref,
                 fc_ref, w_td1_ref, b_td1_ref, w_td2_ref, b_td2_ref,
                 w_bu1_ref, b_bu1_ref, w_bu2_ref, b_bu2_ref,
                 m_cat_ref, b_post_ref,
                 out_ref):
    f32, bf16 = jnp.float32, jnp.bfloat16
    dot = lambda a, b: jnp.dot(a, b, preferred_element_type=f32)
    H, WC = out_ref.shape

    # feature_high: 1x1 conv (+folded BN) + ReLU          -> (H, W*C) f32
    xh_feat = jnp.maximum(dot(xh_ref[...], w_fh_ref[...]) + b_fh_ref[...], 0.0)

    # topdown: GAP (rows = sublane reduce, cols = tiny matmul) -> 1x1 ReLU
    # -> 1x1 Sigmoid with lane tiling folded into w_td2 -> (1, W*C) gate that
    # broadcasts over rows for free.
    gap = dot(jnp.mean(xh_feat, axis=0, keepdims=True), fc_ref[...])   # (1, C)
    td = jnp.maximum(dot(gap, w_td1_ref[...]) + b_td1_ref[...], 0.0)
    td_full = jax.nn.sigmoid(dot(td, w_td2_ref[...]) + b_td2_ref[...])  # (1, WC)

    # bottomup: per-pixel 1x1 ReLU -> 1x1 Sigmoid
    bu = jnp.maximum(dot(xl_ref[...], w_bu1_ref[...]) + b_bu1_ref[...], 0.0)
    bu_wei = jax.nn.sigmoid(dot(bu.astype(bf16), w_bu2_ref[...]) + b_bu2_ref[...])

    # fuse; the factor 2 of both gates is folded into m_cat (post conv is
    # linear in xs, and x2 is an exact power-of-two scale).
    xs = xl_ref[...].astype(f32) * td_full + xh_feat * bu_wei            # (H, WC)
    xs_b = xs.astype(bf16)

    # post: 3x3 conv (+folded BN) + ReLU as ONE (H, 3*WC) @ (3*WC, WC) matmul.
    # Row (dy) shifts are built with slice/concat + an explicit zero border
    # row; the dx taps are already fused inside m_cat.
    zrow = jnp.zeros((1, WC), f32)
    up = jnp.concatenate([zrow, xs[:-1, :]], axis=0).astype(bf16)    # row y -> xs[y-1]
    down = jnp.concatenate([xs[1:, :], zrow], axis=0).astype(bf16)   # row y -> xs[y+1]
    xcat = jnp.concatenate([up, xs_b, down], axis=-1)                # (H, 3*WC)

    out_ref[...] = jnp.maximum(dot(xcat, m_cat_ref[...]) + b_post_ref[...], 0.0)


# --------------------------------------------------------------------------
# One-time constant construction (hoisted out of the per-call jit path).
# --------------------------------------------------------------------------
def prepare_params(params, W):
    f32, bf16 = jnp.float32, jnp.bfloat16
    C = params["w_td2"].shape[1]

    def bd(w):                       # lift 1x1 conv to (.., W*Cin) layout
        return jnp.kron(jnp.eye(W, dtype=f32), w.astype(f32))

    def tile_b(b):                   # tile bias over W in lane order
        return jnp.tile(b.astype(f32), W)[None, :]

    # 3x3 conv: per-dy operators with the three dx taps kron-fused, stacked
    # along K so the whole conv is one matmul; "2 *" gate scale folded in.
    wp = params["w_post"].astype(f32)                                # (3,3,C,C)
    m_rows = []
    for dy in range(3):
        m_dy = sum(jnp.kron(jnp.eye(W, k=-(dx - 1), dtype=f32), wp[dy, dx])
                   for dx in range(3))
        m_rows.append(m_dy)
    m_cat = (2.0 * jnp.concatenate(m_rows, axis=0)).astype(bf16)     # (3*WC, WC)

    return dict(
        w_fh=bd(params["w_fh"]).astype(bf16),
        b_fh=tile_b(params["b_fh"]),
        # column pool (mean over W per channel); the row mean is in-kernel.
        fc=jnp.kron(jnp.ones((W, 1), f32), jnp.eye(C, dtype=f32)) / W,
        w_td1=params["w_td1"].astype(f32),
        b_td1=params["b_td1"][None, :].astype(f32),
        # lane tiling folded into w_td2 (sigmoid commutes with tiling).
        w_td2=jnp.kron(jnp.ones((1, W), f32), params["w_td2"].astype(f32)),
        b_td2=tile_b(params["b_td2"]),
        w_bu1=bd(params["w_bu1"]).astype(bf16),
        b_bu1=tile_b(params["b_bu1"]),
        w_bu2=bd(params["w_bu2"]).astype(bf16),
        b_bu2=tile_b(params["b_bu2"]),
        m_cat=m_cat,
        b_post=tile_b(params["b_post"]),
    )


# --------------------------------------------------------------------------
# Jitted forward: reshape to the lane-dense layout and issue one pallas_call.
# --------------------------------------------------------------------------
@jax.jit
def asym_bi_cha_fuse_reduce(xh_nhwc, xl_nhwc, prep):
    B, H, W, Ch = xh_nhwc.shape
    WC = prep["m_cat"].shape[1]
    C = WC // W
    bf16 = jnp.bfloat16

    xh2 = xh_nhwc.reshape(B * H, W * Ch).astype(bf16)     # lane-dense 2D views
    xl2 = xl_nhwc.reshape(B * H, WC).astype(bf16)

    operands = (xh2, xl2,
                prep["w_fh"], prep["b_fh"],
                prep["fc"], prep["w_td1"], prep["b_td1"],
                prep["w_td2"], prep["b_td2"],
                prep["w_bu1"], prep["b_bu1"],
                prep["w_bu2"], prep["b_bu2"],
                prep["m_cat"], prep["b_post"])

    def full_spec(a):                 # constant block index -> fetched once
        return pl.BlockSpec(a.shape, lambda b: (0, 0))

    in_specs = [pl.BlockSpec((H, W * Ch), lambda b: (b, 0)),
                pl.BlockSpec((H, WC), lambda b: (b, 0))]
    in_specs += [full_spec(a) for a in operands[2:]]

    out2d = pl.pallas_call(
        _fuse_kernel,
        out_shape=jax.ShapeDtypeStruct((B * H, WC), jnp.float32),
        grid=(B,),                     # one image per step; both TCs on v7x
        in_specs=in_specs,
        out_specs=pl.BlockSpec((H, WC), lambda b: (b, 0)),
        compiler_params=pltpu.CompilerParams(
            dimension_semantics=("parallel",)),
    )(*operands)
    return out2d.reshape(B, H, W, C)


# --------------------------------------------------------------------------
# Deterministic parameter construction (synthetic weights, inference-mode BN
# folded into conv weight/bias).  Large conv weights are bf16, biases f32.
# --------------------------------------------------------------------------
def _bn_fold(w, b, gamma, beta, mean, var, eps=1e-5):
    scale = gamma / jnp.sqrt(var + eps)
    return w * scale, (b - mean) * scale + beta


def make_params(key, in_high, in_low, out_channels, r):
    assert in_low == out_channels
    cb = out_channels // r
    keys = iter(jax.random.split(key, 64))

    def conv(cin, cout, k=1):
        shape = (cin, cout) if k == 1 else (k, k, cin, cout)
        w = 0.1 * jax.random.normal(next(keys), shape, jnp.float32)
        b = 0.1 * jax.random.normal(next(keys), (cout,), jnp.float32)
        return w, b

    def bn(c):
        gamma = 1.0 + 0.1 * jax.random.normal(next(keys), (c,), jnp.float32)
        beta = 0.1 * jax.random.normal(next(keys), (c,), jnp.float32)
        mean = 0.1 * jax.random.normal(next(keys), (c,), jnp.float32)
        var = 0.5 + 0.5 * jnp.abs(jax.random.normal(next(keys), (c,),
                                                    jnp.float32))
        return gamma, beta, mean, var

    def fold(cin, cout, k=1, dtype=jnp.float32):
        w, b = conv(cin, cout, k)
        w, b = _bn_fold(w, b, *bn(cout))
        return w.astype(dtype), b            # bias stays f32

    p = {}
    p["w_fh"], p["b_fh"] = fold(in_high, out_channels, dtype=jnp.bfloat16)
    p["w_td1"], p["b_td1"] = fold(out_channels, cb)
    p["w_td2"], p["b_td2"] = fold(cb, out_channels)
    p["w_bu1"], p["b_bu1"] = fold(in_low, cb, dtype=jnp.bfloat16)
    p["w_bu2"], p["b_bu2"] = fold(cb, out_channels, dtype=jnp.bfloat16)
    p["w_post"], p["b_post"] = fold(out_channels, out_channels, k=3,
                                    dtype=jnp.bfloat16)
    return p


# --------------------------------------------------------------------------
# Pure-JAX reference (same stored dtypes, f32 math, bf16 casts mirrored at
# the same points as the kernel) for verification.
# --------------------------------------------------------------------------
def reference(xh, xl, p):
    f32 = jnp.float32
    xh = xh.astype(f32)
    xl = xl.astype(f32)
    relu = lambda x: jnp.maximum(x, 0.0)
    mm = lambda x, w: jnp.einsum('bhwc,cd->bhwd', x, w.astype(f32))

    xh_f = relu(mm(xh, p["w_fh"]) + p["b_fh"])
    gap = jnp.mean(xh_f, axis=(1, 2), keepdims=True)
    td = relu(mm(gap, p["w_td1"]) + p["b_td1"])
    td = jax.nn.sigmoid(mm(td, p["w_td2"]) + p["b_td2"])
    bu = relu(mm(xl, p["w_bu1"]) + p["b_bu1"])
    bu = bu.astype(jnp.bfloat16).astype(f32)      # match kernel MXU operand
    bu = jax.nn.sigmoid(mm(bu, p["w_bu2"]) + p["b_bu2"])
    xs = 2.0 * xl * td + 2.0 * xh_f * bu
    xs = xs.astype(jnp.bfloat16).astype(f32)      # match kernel MXU operand
    H, W = xs.shape[1], xs.shape[2]
    xs_p = jnp.pad(xs, ((0, 0), (1, 1), (1, 1), (0, 0)))
    acc = jnp.zeros_like(xs)
    for dy in range(3):
        for dx in range(3):
            acc = acc + mm(xs_p[:, dy:dy + H, dx:dx + W, :],
                           p["w_post"][dy, dx])
    return relu(acc + p["b_post"])


if __name__ == "__main__":
    B, H, W = 2, 16, 16
    in_high, in_low, out_channels, r = 8, 16, 16, 4

    key = jax.random.PRNGKey(0)
    k_xh, k_xl, k_p = jax.random.split(key, 3)
    # PyTorch-convention NCHW inputs, transposed to NHWC and cast to bf16
    # (same bf16 arrays are fed to both kernel and reference).
    xh_nchw = jax.random.normal(k_xh, (B, in_high, H, W), jnp.float32)
    xl_nchw = jax.random.normal(k_xl, (B, in_low, H, W), jnp.float32)
    xh = jnp.transpose(xh_nchw, (0, 2, 3, 1)).astype(jnp.bfloat16)
    xl = jnp.transpose(xl_nchw, (0, 2, 3, 1)).astype(jnp.bfloat16)

    params = make_params(k_p, in_high, in_low, out_channels, r)
    prep = prepare_params(params, W)          # one-time, outside the jit path

    out = asym_bi_cha_fuse_reduce(xh, xl, prep)
    out = jax.block_until_ready(out)

    ref = reference(xh, xl, params)
    assert out.shape == (B, H, W, out_channels)
    max_err = float(jnp.max(jnp.abs(out - ref)))
    assert jnp.allclose(out, ref, atol=2e-3, rtol=2e-3), max_err
    print("KERNEL_OK")
</pallas_src>

<mosaic_0001>
module attributes {stable_mosaic.version = 11 : i64} {
  func.func @_fuse_kernel(%arg0: i32, %arg1: memref<16x128xbf16, #tpu.memory_space<vmem>>, %arg2: memref<16x256xbf16, #tpu.memory_space<vmem>>, %arg3: memref<128x256xbf16, #tpu.memory_space<vmem>>, %arg4: memref<1x256xf32, #tpu.memory_space<vmem>>, %arg5: memref<256x16xf32, #tpu.memory_space<vmem>>, %arg6: memref<16x4xf32, #tpu.memory_space<vmem>>, %arg7: memref<1x4xf32, #tpu.memory_space<vmem>>, %arg8: memref<4x256xf32, #tpu.memory_space<vmem>>, %arg9: memref<1x256xf32, #tpu.memory_space<vmem>>, %arg10: memref<256x64xbf16, #tpu.memory_space<vmem>>, %arg11: memref<1x64xf32, #tpu.memory_space<vmem>>, %arg12: memref<64x256xbf16, #tpu.memory_space<vmem>>, %arg13: memref<1x256xf32, #tpu.memory_space<vmem>>, %arg14: memref<768x256xbf16, #tpu.memory_space<vmem>>, %arg15: memref<1x256xf32, #tpu.memory_space<vmem>>, %arg16: memref<16x256xf32, #tpu.memory_space<vmem>>) attributes {dimension_semantics = [#tpu.dimension_semantics<parallel>], iteration_bounds = array<i64: 2>, scalar_prefetch = 0 : i64, scratch_operands = 0 : i64, tpu.core_type = #tpu.core_type<tc>, window_params = [{transform_indices = @transform_0, window_bounds = array<i64: 16, 128>}, {transform_indices = @transform_1, window_bounds = array<i64: 16, 256>}, {pipeline_mode = #tpu.pipeline_mode<synchronous>, transform_indices = @transform_2, window_bounds = array<i64: 128, 256>}, {pipeline_mode = #tpu.pipeline_mode<synchronous>, transform_indices = @transform_3, window_bounds = array<i64: 1, 256>}, {pipeline_mode = #tpu.pipeline_mode<synchronous>, transform_indices = @transform_4, window_bounds = array<i64: 256, 16>}, {pipeline_mode = #tpu.pipeline_mode<synchronous>, transform_indices = @transform_5, window_bounds = array<i64: 16, 4>}, {pipeline_mode = #tpu.pipeline_mode<synchronous>, transform_indices = @transform_6, window_bounds = array<i64: 1, 4>}, {pipeline_mode = #tpu.pipeline_mode<synchronous>, transform_indices = @transform_7, window_bounds = array<i64: 4, 256>}, {pipeline_mode = #tpu.pipeline_mode<synchronous>, transform_indices = @transform_8, window_bounds = array<i64: 1, 256>}, {pipeline_mode = #tpu.pipeline_mode<synchronous>, transform_indices = @transform_9, window_bounds = array<i64: 256, 64>}, {pipeline_mode = #tpu.pipeline_mode<synchronous>, transform_indices = @transform_10, window_bounds = array<i64: 1, 64>}, {pipeline_mode = #tpu.pipeline_mode<synchronous>, transform_indices = @transform_11, window_bounds = array<i64: 64, 256>}, {pipeline_mode = #tpu.pipeline_mode<synchronous>, transform_indices = @transform_12, window_bounds = array<i64: 1, 256>}, {pipeline_mode = #tpu.pipeline_mode<synchronous>, transform_indices = @transform_13, window_bounds = array<i64: 768, 256>}, {pipeline_mode = #tpu.pipeline_mode<synchronous>, transform_indices = @transform_14, window_bounds = array<i64: 1, 256>}, {transform_indices = @transform_15, window_bounds = array<i64: 16, 256>}]} {
    %c0 = arith.constant 0 : index
    %c0_0 = arith.constant 0 : index
    %0 = vector.load %arg1[%c0, %c0_0] : memref<16x128xbf16, #tpu.memory_space<vmem>>, vector<16x128xbf16>
    %c0_1 = arith.constant 0 : index
    %c0_2 = arith.constant 0 : index
    %1 = vector.load %arg3[%c0_1, %c0_2] : memref<128x256xbf16, #tpu.memory_space<vmem>>, vector<128x256xbf16>
    %cst = arith.constant dense<0.000000e+00> : vector<16x256xf32>
    %2 = tpu.matmul %0, %1, %cst {dimension_numbers = #tpu.dot_dimension_numbers<[1], [0], [0], [1], [0, 0, 1, 1], [], []>} : vector<16x128xbf16>, vector<128x256xbf16>, vector<16x256xf32> -> vector<16x256xf32>
    %c0_3 = arith.constant 0 : index
    %c0_4 = arith.constant 0 : index
    %3 = vector.load %arg4[%c0_3, %c0_4] : memref<1x256xf32, #tpu.memory_space<vmem>>, vector<1x256xf32>
    %4 = vector.broadcast %3 : vector<1x256xf32> to vector<16x256xf32>
    %5 = arith.addf %2, %4 : vector<16x256xf32>
    %cst_5 = arith.constant 0.000000e+00 : f32
    %6 = vector.broadcast %cst_5 : f32 to vector<16x256xf32>
    %7 = arith.maximumf %5, %6 : vector<16x256xf32>
    %cst_6 = arith.constant dense<0.000000e+00> : vector<256xf32>
    %8 = vector.multi_reduction <add>, %7, %cst_6 [0] : vector<16x256xf32> to vector<256xf32>
    %9 = vector.shape_cast %8 : vector<256xf32> to vector<1x256xf32>
    %cst_7 = arith.constant 1.600000e+01 : f32
    %10 = vector.broadcast %cst_7 : f32 to vector<1x256xf32>
    %11 = arith.divf %9, %10 : vector<1x256xf32>
    %c0_8 = arith.constant 0 : index
    %c0_9 = arith.constant 0 : index
    %12 = vector.load %arg5[%c0_8, %c0_9] : memref<256x16xf32, #tpu.memory_space<vmem>>, vector<256x16xf32>
    %cst_10 = arith.constant dense<0.000000e+00> : vector<1x16xf32>
    %13 = tpu.matmul %11, %12, %cst_10 {dimension_numbers = #tpu.dot_dimension_numbers<[1], [0], [0], [1], [0, 0, 1, 1], [], []>} : vector<1x256xf32>, vector<256x16xf32>, vector<1x16xf32> -> vector<1x16xf32>
    %c0_11 = arith.constant 0 : index
    %c0_12 = arith.constant 0 : index
    %14 = vector.load %arg6[%c0_11, %c0_12] : memref<16x4xf32, #tpu.memory_space<vmem>>, vector<16x4xf32>
    %cst_13 = arith.constant dense<0.000000e+00> : vector<1x4xf32>
    %15 = tpu.matmul %13, %14, %cst_13 {dimension_numbers = #tpu.dot_dimension_numbers<[1], [0], [0], [1], [0, 0, 1, 1], [], []>} : vector<1x16xf32>, vector<16x4xf32>, vector<1x4xf32> -> vector<1x4xf32>
    %c0_14 = arith.constant 0 : index
    %c0_15 = arith.constant 0 : index
    %16 = vector.load %arg7[%c0_14, %c0_15] : memref<1x4xf32, #tpu.memory_space<vmem>>, vector<1x4xf32>
    %17 = arith.addf %15, %16 : vector<1x4xf32>
    %cst_16 = arith.constant 0.000000e+00 : f32
    %18 = vector.broadcast %cst_16 : f32 to vector<1x4xf32>
    %19 = arith.maximumf %17, %18 : vector<1x4xf32>
    %c0_17 = arith.constant 0 : index
    %c0_18 = arith.constant 0 : index
    %20 = vector.load %arg8[%c0_17, %c0_18] : memref<4x256xf32, #tpu.memory_space<vmem>>, vector<4x256xf32>
    %cst_19 = arith.constant dense<0.000000e+00> : vector<1x256xf32>
    %21 = tpu.matmul %19, %20, %cst_19 {dimension_numbers = #tpu.dot_dimension_numbers<[1], [0], [0], [1], [0, 0, 1, 1], [], []>} : vector<1x4xf32>, vector<4x256xf32>, vector<1x256xf32> -> vector<1x256xf32>
    %c0_20 = arith.constant 0 : index
    %c0_21 = arith.constant 0 : index
    %22 = vector.load %arg9[%c0_20, %c0_21] : memref<1x256xf32, #tpu.memory_space<vmem>>, vector<1x256xf32>
    %23 = arith.addf %21, %22 : vector<1x256xf32>
    %24 = arith.negf %23 : vector<1x256xf32>
    %25 = math.exp %24 : vector<1x256xf32>
    %cst_22 = arith.constant 1.000000e+00 : f32
    %26 = vector.broadcast %cst_22 : f32 to vector<1x256xf32>
    %27 = arith.addf %26, %25 : vector<1x256xf32>
    %28 = arith.divf %26, %27 : vector<1x256xf32>
    %c0_23 = arith.constant 0 : index
    %c0_24 = arith.constant 0 : index
    %29 = vector.load %arg2[%c0_23, %c0_24] : memref<16x256xbf16, #tpu.memory_space<vmem>>, vector<16x256xbf16>
    %c0_25 = arith.constant 0 : index
    %c0_26 = arith.constant 0 : index
    %30 = vector.load %arg10[%c0_25, %c0_26] : memref<256x64xbf16, #tpu.memory_space<vmem>>, vector<256x64xbf16>
    %cst_27 = arith.constant dense<0.000000e+00> : vector<16x64xf32>
    %31 = tpu.matmul %29, %30, %cst_27 {dimension_numbers = #tpu.dot_dimension_numbers<[1], [0], [0], [1], [0, 0, 1, 1], [], []>} : vector<16x256xbf16>, vector<256x64xbf16>, vector<16x64xf32> -> vector<16x64xf32>
    %c0_28 = arith.constant 0 : index
    %c0_29 = arith.constant 0 : index
    %32 = vector.load %arg11[%c0_28, %c0_29] : memref<1x64xf32, #tpu.memory_space<vmem>>, vector<1x64xf32>
    %33 = vector.broadcast %32 : vector<1x64xf32> to vector<16x64xf32>
    %34 = arith.addf %31, %33 : vector<16x64xf32>
    %cst_30 = arith.constant 0.000000e+00 : f32
    %35 = vector.broadcast %cst_30 : f32 to vector<16x64xf32>
    %36 = arith.maximumf %34, %35 : vector<16x64xf32>
    %37 = arith.truncf %36 : vector<16x64xf32> to vector<16x64xbf16>
    %c0_31 = arith.constant 0 : index
    %c0_32 = arith.constant 0 : index
    %38 = vector.load %arg12[%c0_31, %c0_32] : memref<64x256xbf16, #tpu.memory_space<vmem>>, vector<64x256xbf16>
    %cst_33 = arith.constant dense<0.000000e+00> : vector<16x256xf32>
    %39 = tpu.matmul %37, %38, %cst_33 {dimension_numbers = #tpu.dot_dimension_numbers<[1], [0], [0], [1], [0, 0, 1, 1], [], []>} : vector<16x64xbf16>, vector<64x256xbf16>, vector<16x256xf32> -> vector<16x256xf32>
    %c0_34 = arith.constant 0 : index
    %c0_35 = arith.constant 0 : index
    %40 = vector.load %arg13[%c0_34, %c0_35] : memref<1x256xf32, #tpu.memory_space<vmem>>, vector<1x256xf32>
    %41 = vector.broadcast %40 : vector<1x256xf32> to vector<16x256xf32>
    %42 = arith.addf %39, %41 : vector<16x256xf32>
    %43 = arith.negf %42 : vector<16x256xf32>
    %44 = math.exp %43 : vector<16x256xf32>
    %cst_36 = arith.constant 1.000000e+00 : f32
    %45 = vector.broadcast %cst_36 : f32 to vector<16x256xf32>
    %46 = arith.addf %45, %44 : vector<16x256xf32>
    %47 = arith.divf %45, %46 : vector<16x256xf32>
    %c0_37 = arith.constant 0 : index
    %c0_38 = arith.constant 0 : index
    %48 = vector.load %arg2[%c0_37, %c0_38] : memref<16x256xbf16, #tpu.memory_space<vmem>>, vector<16x256xbf16>
    %49 = arith.extf %48 : vector<16x256xbf16> to vector<16x256xf32>
    %50 = vector.broadcast %28 : vector<1x256xf32> to vector<16x256xf32>
    %51 = arith.mulf %49, %50 : vector<16x256xf32>
    %52 = arith.mulf %7, %47 : vector<16x256xf32>
    %53 = arith.addf %51, %52 : vector<16x256xf32>
    %54 = arith.truncf %53 : vector<16x256xf32> to vector<16x256xbf16>
    %cst_39 = arith.constant 0.000000e+00 : f32
    %55 = vector.broadcast %cst_39 : f32 to vector<1x256xf32>
    %56 = vector.extract_strided_slice %53 {offsets = [0, 0], sizes = [15, 256], strides = [1, 1]} : vector<16x256xf32> to vector<15x256xf32>
    %57 = tpu.concatenate %55, %56 in 0 : vector<1x256xf32>, vector<15x256xf32> -> vector<16x256xf32>
    %58 = arith.truncf %57 : vector<16x256xf32> to vector<16x256xbf16>
    %59 = vector.extract_strided_slice %53 {offsets = [1, 0], sizes = [15, 256], strides = [1, 1]} : vector<16x256xf32> to vector<15x256xf32>
    %60 = tpu.concatenate %59, %55 in 0 : vector<15x256xf32>, vector<1x256xf32> -> vector<16x256xf32>
    %61 = arith.truncf %60 : vector<16x256xf32> to vector<16x256xbf16>
    %62 = tpu.concatenate %58, %54, %61 in 1 : vector<16x256xbf16>, vector<16x256xbf16>, vector<16x256xbf16> -> vector<16x768xbf16>
    %c0_40 = arith.constant 0 : index
    %c0_41 = arith.constant 0 : index
    %63 = vector.load %arg14[%c0_40, %c0_41] : memref<768x256xbf16, #tpu.memory_space<vmem>>, vector<768x256xbf16>
    %cst_42 = arith.constant dense<0.000000e+00> : vector<16x256xf32>
    %64 = tpu.matmul %62, %63, %cst_42 {dimension_numbers = #tpu.dot_dimension_numbers<[1], [0], [0], [1], [0, 0, 1, 1], [], []>} : vector<16x768xbf16>, vector<768x256xbf16>, vector<16x256xf32> -> vector<16x256xf32>
    %c0_43 = arith.constant 0 : index
    %c0_44 = arith.constant 0 : index
    %65 = vector.load %arg15[%c0_43, %c0_44] : memref<1x256xf32, #tpu.memory_space<vmem>>, vector<1x256xf32>
    %66 = vector.broadcast %65 : vector<1x256xf32> to vector<16x256xf32>
    %67 = arith.addf %64, %66 : vector<16x256xf32>
    %cst_45 = arith.constant 0.000000e+00 : f32
    %68 = vector.broadcast %cst_45 : f32 to vector<16x256xf32>
    %69 = arith.maximumf %67, %68 : vector<16x256xf32>
    %c0_46 = arith.constant 0 : index
    %c0_47 = arith.constant 0 : index
    %70 = vector.load %arg16[%c0_46, %c0_47] : memref<16x256xf32, #tpu.memory_space<vmem>>, vector<16x256xf32>
    tpu.vector_store %arg16[%c0_46, %c0_47], %69 {strides = array<i32>} : memref<16x256xf32, #tpu.memory_space<vmem>>, vector<16x256xf32>,
    return
  }
  func.func @transform_0(%arg0: i32) -> (i32, i32) {
    %c0_i32 = arith.constant 0 : i32
    %c0_i32_0 = arith.constant 0 : i32
    return %arg0, %c0_i32 : i32, i32
  }
  func.func @transform_1(%arg0: i32) -> (i32, i32) {
    %c0_i32 = arith.constant 0 : i32
    %c0_i32_0 = arith.constant 0 : i32
    return %arg0, %c0_i32 : i32, i32
  }
  func.func @transform_2(%arg0: i32) -> (i32, i32) {
    %c0_i32 = arith.constant 0 : i32
    %c0_i32_0 = arith.constant 0 : i32
    %c0_i32_1 = arith.constant 0 : i32
    return %c0_i32, %c0_i32_0 : i32, i32
  }
  func.func @transform_3(%arg0: i32) -> (i32, i32) {
    %c0_i32 = arith.constant 0 : i32
    %c0_i32_0 = arith.constant 0 : i32
    %c0_i32_1 = arith.constant 0 : i32
    return %c0_i32, %c0_i32_0 : i32, i32
  }
  func.func @transform_4(%arg0: i32) -> (i32, i32) {
    %c0_i32 = arith.constant 0 : i32
    %c0_i32_0 = arith.constant 0 : i32
    %c0_i32_1 = arith.constant 0 : i32
    return %c0_i32, %c0_i32_0 : i32, i32
  }
  func.func @transform_5(%arg0: i32) -> (i32, i32) {
    %c0_i32 = arith.constant 0 : i32
    %c0_i32_0 = arith.constant 0 : i32
    %c0_i32_1 = arith.constant 0 : i32
    return %c0_i32, %c0_i32_0 : i32, i32
  }
  func.func @transform_6(%arg0: i32) -> (i32, i32) {
    %c0_i32 = arith.constant 0 : i32
    %c0_i32_0 = arith.constant 0 : i32
    %c0_i32_1 = arith.constant 0 : i32
    return %c0_i32, %c0_i32_0 : i32, i32
  }
  func.func @transform_7(%arg0: i32) -> (i32, i32) {
    %c0_i32 = arith.constant 0 : i32
    %c0_i32_0 = arith.constant 0 : i32
    %c0_i32_1 = arith.constant 0 : i32
    return %c0_i32, %c0_i32_0 : i32, i32
  }
  func.func @transform_8(%arg0: i32) -> (i32, i32) {
    %c0_i32 = arith.constant 0 : i32
    %c0_i32_0 = arith.constant 0 : i32
    %c0_i32_1 = arith.constant 0 : i32
    return %c0_i32, %c0_i32_0 : i32, i32
  }
  func.func @transform_9(%arg0: i32) -> (i32, i32) {
    %c0_i32 = arith.constant 0 : i32
    %c0_i32_0 = arith.constant 0 : i32
    %c0_i32_1 = arith.constant 0 : i32
    return %c0_i32, %c0_i32_0 : i32, i32
  }
  func.func @transform_10(%arg0: i32) -> (i32, i32) {
    %c0_i32 = arith.constant 0 : i32
    %c0_i32_0 = arith.constant 0 : i32
    %c0_i32_1 = arith.constant 0 : i32
    return %c0_i32, %c0_i32_0 : i32, i32
  }
  func.func @transform_11(%arg0: i32) -> (i32, i32) {
    %c0_i32 = arith.constant 0 : i32
    %c0_i32_0 = arith.constant 0 : i32
    %c0_i32_1 = arith.constant 0 : i32
    return %c0_i32, %c0_i32_0 : i32, i32
  }
  func.func @transform_12(%arg0: i32) -> (i32, i32) {
    %c0_i32 = arith.constant 0 : i32
    %c0_i32_0 = arith.constant 0 : i32
    %c0_i32_1 = arith.constant 0 : i32
    return %c0_i32, %c0_i32_0 : i32, i32
  }
  func.func @transform_13(%arg0: i32) -> (i32, i32) {
    %c0_i32 = arith.constant 0 : i32
    %c0_i32_0 = arith.constant 0 : i32
    %c0_i32_1 = arith.constant 0 : i32
    return %c0_i32, %c0_i32_0 : i32, i32
  }
  func.func @transform_14(%arg0: i32) -> (i32, i32) {
    %c0_i32 = arith.constant 0 : i32
    %c0_i32_0 = arith.constant 0 : i32
    %c0_i32_1 = arith.constant 0 : i32
    return %c0_i32, %c0_i32_0 : i32, i32
  }
  func.func @transform_15(%arg0: i32) -> (i32, i32) {
    %c0_i32 = arith.constant 0 : i32
    %c0_i32_0 = arith.constant 0 : i32
    return %arg0, %c0_i32 : i32, i32
  }
}

</mosaic_0001>

<llo_original>
// kernel: asym_bi_cha_fuse_reduce.1
$region0: #{asym_bi_cha_fuse_reduce.1}
  #allocation0 [shape = 'u32[]', space=smem, size = 0x4, offset = 0x4, fixed_abs, tag = 'smem constant byte address 0x4 - core index']
  #allocation1 [shape = 'u32[144,128]{1,0:T(1,128)}', space=vmem, size = 0x12000, scoped, tag = 'internal scratch']
  %s0 = inlined_call_operand.vmem [shape: bf16[32,128], index: 0, kind: input, shape index: {}]
  %s1 = inlined_call_operand.vmem [shape: bf16[32,256], index: 1, kind: input, shape index: {}]
  %s2 = inlined_call_operand.vmem [shape: bf16[128,256], index: 2, kind: input, shape index: {}]
  %s3 = inlined_call_operand.vmem [shape: f32[1,256], index: 3, kind: input, shape index: {}]
  %s4 = inlined_call_operand.vmem [shape: f32[256,16], index: 4, kind: input, shape index: {}]
  %s5 = inlined_call_operand.vmem [shape: f32[16,4], index: 5, kind: input, shape index: {}]
  %s6 = inlined_call_operand.vmem [shape: f32[1,4], index: 6, kind: input, shape index: {}]
  %s7 = inlined_call_operand.vmem [shape: f32[4,256], index: 7, kind: input, shape index: {}]
  %s8 = inlined_call_operand.vmem [shape: f32[1,256], index: 8, kind: input, shape index: {}]
  %s9 = inlined_call_operand.vmem [shape: bf16[256,64], index: 9, kind: input, shape index: {}]
  %s10 = inlined_call_operand.vmem [shape: f32[1,64], index: 10, kind: input, shape index: {}]
  %s11 = inlined_call_operand.vmem [shape: bf16[64,256], index: 11, kind: input, shape index: {}]
  %s12 = inlined_call_operand.vmem [shape: f32[1,256], index: 12, kind: input, shape index: {}]
  %s13 = inlined_call_operand.vmem [shape: bf16[768,256], index: 13, kind: input, shape index: {}]
  %s14 = inlined_call_operand.vmem [shape: f32[1,256], index: 14, kind: input, shape index: {}]
  %s15 = inlined_call_operand.vmem [shape: f32[32,256], index: 15, kind: output, shape index: {}]
  %s16 = sld [smem:[#allocation0]]
  $region93: #{asym_bi_cha_fuse_reduce.1} parent=0
    _
  %s18 = ssub.s32 1, %s16
  %s19 = scalar_select 0, %s18, %s16
  loop: start=0, step=1, limit=4
  $region2: #{asym_bi_cha_fuse_reduce.1} parent=0 // loop_pre_header
    _
  $region3: #{asym_bi_cha_fuse_reduce.1} parent=0 // loop_header
    %s21 = sphi 0, %s25
    %p22 = scmp.ge.s32.totalorder %s21, 4
    %s31 = sphi 0, %s33
    %s34 = sphi 0, %s31
    %s35 = sphi 0, %s34
    %s51 = sphi 0, %s35
    %s57 = sphi 0, %s59
    %s60 = sphi 0, %s57
    %s61 = sphi 0, %s60
    %s77 = sphi 0, %s61
    %s81 = sphi 0, %s81
    %s83 = sphi 0, %s81
    %s84 = sphi 0, %s83
    %s98 = sphi 0, %s84
    %s102 = sphi 0, %s102
    %s104 = sphi 0, %s102
    %s105 = sphi 0, %s104
    %s119 = sphi 0, %s105
    %s123 = sphi 0, %s123
    %s125 = sphi 0, %s123
    %s126 = sphi 0, %s125
    %s140 = sphi 0, %s126
    %s144 = sphi 0, %s144
    %s146 = sphi 0, %s144
    %s147 = sphi 0, %s146
    %s161 = sphi 0, %s147
    %s165 = sphi 0, %s165
    %s167 = sphi 0, %s165
    %s168 = sphi 0, %s167
    %s182 = sphi 0, %s168
    %s186 = sphi 0, %s186
    %s188 = sphi 0, %s186
    %s189 = sphi 0, %s188
    %s203 = sphi 0, %s189
    %s207 = sphi 0, %s207
    %s209 = sphi 0, %s207
    %s210 = sphi 0, %s209
    %s224 = sphi 0, %s210
    %s228 = sphi 0, %s228
    %s230 = sphi 0, %s228
    %s231 = sphi 0, %s230
    %s245 = sphi 0, %s231
    %s249 = sphi 0, %s249
    %s251 = sphi 0, %s249
    %s252 = sphi 0, %s251
    %s266 = sphi 0, %s252
    %s270 = sphi 0, %s270
    %s272 = sphi 0, %s270
    %s273 = sphi 0, %s272
    %s287 = sphi 0, %s273
    %s291 = sphi 0, %s291
    %s293 = sphi 0, %s291
    %s294 = sphi 0, %s293
    %s308 = sphi 0, %s294
    %s312 = sphi 0, %s312
    %s314 = sphi 0, %s312
    %s315 = sphi 0, %s314
    %s329 = sphi 0, %s315
    %s333 = sphi 0, %s333
    %s335 = sphi 0, %s333
    %s336 = sphi 0, %s335
    %s350 = sphi 0, %s336
    %s356 = sphi 0, %s358
    %s359 = sphi 0, %s356
    %s360 = sphi 0, %s359
    %s376 = sphi 0, %s360
  $region4: #{asym_bi_cha_fuse_reduce.1} parent=0 // loop_header_branch
    %24 = sbr.rel (%p22) target = $region8
  $region5: #{asym_bi_cha_fuse_reduce.1} parent=0 // loop_body
    %s26 = ssub.s32 %s21, 1
    %s27 = ssub.s32 %s21, 2
    %s28 = sadd.s32 %s21, 1
    %s29 = ssub.s32 %s21, %s28
    %p30 = scmp.eq.s32.totalorder %s29, 0
    %s32 = sadd.s32 %s31, 1
    %s33 = scalar_select %p30, %s31, %s32
    %p36 = pneg %p30
    %p37 = scmp.eq.s32.totalorder %s21, 1
    %p38 = por %p36, %p37
    %p39 = scmp.ne.s32.totalorder %s31, %s34
    %p40 = scmp.eq.s32.totalorder %s21, 0
    %p41 = por %p39, %p40
    %p42 = scmp.ne.s32.totalorder %s31, %s34
    %p43 = scmp.eq.s32.totalorder %s26, 1
    %p44 = por %p42, %p43
    %p45 = scmp.ne.s32.totalorder %s34, %s35
    %p46 = scmp.eq.s32.totalorder %s26, 0
    %p47 = por %p45, %p46
    %p48 = scmp.ne.s32.totalorder %s34, %s35
    %p49 = scmp.eq.s32.totalorder %s27, 1
    %p50 = por %p48, %p49
    %p52 = scmp.ne.s32.totalorder %s35, %s51
    %p53 = scmp.eq.s32.totalorder %s27, 0
    %p54 = por %p52, %p53
    %s55 = ssub.s32 %s21, %s28
    %p56 = scmp.eq.s32.totalorder %s55, 0
    %s58 = sadd.s32 %s57, 1
    %s59 = scalar_select %p56, %s57, %s58
    %p62 = pneg %p56
    %p63 = scmp.eq.s32.totalorder %s21, 1
    %p64 = por %p62, %p63
    %p65 = scmp.ne.s32.totalorder %s57, %s60
    %p66 = scmp.eq.s32.totalorder %s21, 0
    %p67 = por %p65, %p66
    %p68 = scmp.ne.s32.totalorder %s57, %s60
    %p69 = scmp.eq.s32.totalorder %s26, 1
    %p70 = por %p68, %p69
    %p71 = scmp.ne.s32.totalorder %s60, %s61
    %p72 = scmp.eq.s32.totalorder %s26, 0
    %p73 = por %p71, %p72
    %p74 = scmp.ne.s32.totalorder %s60, %s61
    %p75 = scmp.eq.s32.totalorder %s27, 1
    %p76 = por %p74, %p75
    %p78 = scmp.ne.s32.totalorder %s61, %s77
    %p79 = scmp.eq.s32.totalorder %s27, 0
    %p80 = por %p78, %p79
    %s82 = sadd.s32 %s81, 1
    %p85 = scmp.eq.s32.totalorder %s21, 1
    %p86 = scmp.ne.s32.totalorder %s81, %s83
    %p87 = scmp.eq.s32.totalorder %s21, 0
    %p88 = por %p86, %p87
    %p89 = scmp.ne.s32.totalorder %s81, %s83
    %p90 = scmp.eq.s32.totalorder %s26, 1
    %p91 = por %p89, %p90
    %p92 = scmp.ne.s32.totalorder %s83, %s84
    %p93 = scmp.eq.s32.totalorder %s26, 0
    %p94 = por %p92, %p93
    %p95 = scmp.ne.s32.totalorder %s83, %s84
    %p96 = scmp.eq.s32.totalorder %s27, 1
    %p97 = por %p95, %p96
    %p99 = scmp.ne.s32.totalorder %s84, %s98
    %p100 = scmp.eq.s32.totalorder %s27, 0
    %p101 = por %p99, %p100
    %s103 = sadd.s32 %s102, 1
    %p106 = scmp.eq.s32.totalorder %s21, 1
    %p107 = scmp.ne.s32.totalorder %s102, %s104
    %p108 = scmp.eq.s32.totalorder %s21, 0
    %p109 = por %p107, %p108
    %p110 = scmp.ne.s32.totalorder %s102, %s104
    %p111 = scmp.eq.s32.totalorder %s26, 1
    %p112 = por %p110, %p111
    %p113 = scmp.ne.s32.totalorder %s104, %s105
    %p114 = scmp.eq.s32.totalorder %s26, 0
    %p115 = por %p113, %p114
    %p116 = scmp.ne.s32.totalorder %s104, %s105
    %p117 = scmp.eq.s32.totalorder %s27, 1
    %p118 = por %p116, %p117
    %p120 = scmp.ne.s32.totalorder %s105, %s119
    %p121 = scmp.eq.s32.totalorder %s27, 0
    %p122 = por %p120, %p121
    %s124 = sadd.s32 %s123, 1
    %p127 = scmp.eq.s32.totalorder %s21, 1
    %p128 = scmp.ne.s32.totalorder %s123, %s125
    %p129 = scmp.eq.s32.totalorder %s21, 0
    %p130 = por %p128, %p129
    %p131 = scmp.ne.s32.totalorder %s123, %s125
    %p132 = scmp.eq.s32.totalorder %s26, 1
    %p133 = por %p131, %p132
    %p134 = scmp.ne.s32.totalorder %s125, %s126
    %p135 = scmp.eq.s32.totalorder %s26, 0
    %p136 = por %p134, %p135
    %p137 = scmp.ne.s32.totalorder %s125, %s126
    %p138 = scmp.eq.s32.totalorder %s27, 1
    %p139 = por %p137, %p138
    %p141 = scmp.ne.s32.totalorder %s126, %s140
    %p142 = scmp.eq.s32.totalorder %s27, 0
    %p143 = por %p141, %p142
    %s145 = sadd.s32 %s144, 1
    %p148 = scmp.eq.s32.totalorder %s21, 1
    %p149 = scmp.ne.s32.totalorder %s144, %s146
    %p150 = scmp.eq.s32.totalorder %s21, 0
    %p151 = por %p149, %p150
    %p152 = scmp.ne.s32.totalorder %s144, %s146
    %p153 = scmp.eq.s32.totalorder %s26, 1
    %p154 = por %p152, %p153
    %p155 = scmp.ne.s32.totalorder %s146, %s147
    %p156 = scmp.eq.s32.totalorder %s26, 0
    %p157 = por %p155, %p156
    %p158 = scmp.ne.s32.totalorder %s146, %s147
    %p159 = scmp.eq.s32.totalorder %s27, 1
    %p160 = por %p158, %p159
    %p162 = scmp.ne.s32.totalorder %s147, %s161
    %p163 = scmp.eq.s32.totalorder %s27, 0
    %p164 = por %p162, %p163
    %s166 = sadd.s32 %s165, 1
    %p169 = scmp.eq.s32.totalorder %s21, 1
    %p170 = scmp.ne.s32.totalorder %s165, %s167
    %p171 = scmp.eq.s32.totalorder %s21, 0
    %p172 = por %p170, %p171
    %p173 = scmp.ne.s32.totalorder %s165, %s167
    %p174 = scmp.eq.s32.totalorder %s26, 1
    %p175 = por %p173, %p174
    %p176 = scmp.ne.s32.totalorder %s167, %s168
    %p177 = scmp.eq.s32.totalorder %s26, 0
    %p178 = por %p176, %p177
    %p179 = scmp.ne.s32.totalorder %s167, %s168
    %p180 = scmp.eq.s32.totalorder %s27, 1
    %p181 = por %p179, %p180
    %p183 = scmp.ne.s32.totalorder %s168, %s182
    %p184 = scmp.eq.s32.totalorder %s27, 0
    %p185 = por %p183, %p184
    %s187 = sadd.s32 %s186, 1
    %p190 = scmp.eq.s32.totalorder %s21, 1
    %p191 = scmp.ne.s32.totalorder %s186, %s188
    %p192 = scmp.eq.s32.totalorder %s21, 0
    %p193 = por %p191, %p192
    %p194 = scmp.ne.s32.totalorder %s186, %s188
    %p195 = scmp.eq.s32.totalorder %s26, 1
    %p196 = por %p194, %p195
    %p197 = scmp.ne.s32.totalorder %s188, %s189
    %p198 = scmp.eq.s32.totalorder %s26, 0
    %p199 = por %p197, %p198
    %p200 = scmp.ne.s32.totalorder %s188, %s189
    %p201 = scmp.eq.s32.totalorder %s27, 1
    %p202 = por %p200, %p201
    %p204 = scmp.ne.s32.totalorder %s189, %s203
    %p205 = scmp.eq.s32.totalorder %s27, 0
    %p206 = por %p204, %p205
    %s208 = sadd.s32 %s207, 1
    %p211 = scmp.eq.s32.totalorder %s21, 1
    %p212 = scmp.ne.s32.totalorder %s207, %s209
    %p213 = scmp.eq.s32.totalorder %s21, 0
    %p214 = por %p212, %p213
    %p215 = scmp.ne.s32.totalorder %s207, %s209
    %p216 = scmp.eq.s32.totalorder %s26, 1
    %p217 = por %p215, %p216
    %p218 = scmp.ne.s32.totalorder %s209, %s210
    %p219 = scmp.eq.s32.totalorder %s26, 0
    %p220 = por %p218, %p219
    %p221 = scmp.ne.s32.totalorder %s209, %s210
    %p222 = scmp.eq.s32.totalorder %s27, 1
    %p223 = por %p221, %p222
    %p225 = scmp.ne.s32.totalorder %s210, %s224
    %p226 = scmp.eq.s32.totalorder %s27, 0
    %p227 = por %p225, %p226
    %s229 = sadd.s32 %s228, 1
    %p232 = scmp.eq.s32.totalorder %s21, 1
    %p233 = scmp.ne.s32.totalorder %s228, %s230
    %p234 = scmp.eq.s32.totalorder %s21, 0
    %p235 = por %p233, %p234
    %p236 = scmp.ne.s32.totalorder %s228, %s230
    %p237 = scmp.eq.s32.totalorder %s26, 1
    %p238 = por %p236, %p237
    %p239 = scmp.ne.s32.totalorder %s230, %s231
    %p240 = scmp.eq.s32.totalorder %s26, 0
    %p241 = por %p239, %p240
    %p242 = scmp.ne.s32.totalorder %s230, %s231
    %p243 = scmp.eq.s32.totalorder %s27, 1
    %p244 = por %p242, %p243
    %p246 = scmp.ne.s32.totalorder %s231, %s245
    %p247 = scmp.eq.s32.totalorder %s27, 0
    %p248 = por %p246, %p247
    %s250 = sadd.s32 %s249, 1
    %p253 = scmp.eq.s32.totalorder %s21, 1
    %p254 = scmp.ne.s32.totalorder %s249, %s251
    %p255 = scmp.eq.s32.totalorder %s21, 0
    %p256 = por %p254, %p255
    %p257 = scmp.ne.s32.totalorder %s249, %s251
    %p258 = scmp.eq.s32.totalorder %s26, 1
    %p259 = por %p257, %p258
    %p260 = scmp.ne.s32.totalorder %s251, %s252
    %p261 = scmp.eq.s32.totalorder %s26, 0
    %p262 = por %p260, %p261
    %p263 = scmp.ne.s32.totalorder %s251, %s252
    %p264 = scmp.eq.s32.totalorder %s27, 1
    %p265 = por %p263, %p264
    %p267 = scmp.ne.s32.totalorder %s252, %s266
    %p268 = scmp.eq.s32.totalorder %s27, 0
    %p269 = por %p267, %p268
    %s271 = sadd.s32 %s270, 1
    %p274 = scmp.eq.s32.totalorder %s21, 1
    %p275 = scmp.ne.s32.totalorder %s270, %s272
    %p276 = scmp.eq.s32.totalorder %s21, 0
    %p277 = por %p275, %p276
    %p278 = scmp.ne.s32.totalorder %s270, %s272
    %p279 = scmp.eq.s32.totalorder %s26, 1
    %p280 = por %p278, %p279
    %p281 = scmp.ne.s32.totalorder %s272, %s273
    %p282 = scmp.eq.s32.totalorder %s26, 0
    %p283 = por %p281, %p282
    %p284 = scmp.ne.s32.totalorder %s272, %s273
    %p285 = scmp.eq.s32.totalorder %s27, 1
    %p286 = por %p284, %p285
    %p288 = scmp.ne.s32.totalorder %s273, %s287
    %p289 = scmp.eq.s32.totalorder %s27, 0
    %p290 = por %p288, %p289
    %s292 = sadd.s32 %s291, 1
    %p295 = scmp.eq.s32.totalorder %s21, 1
    %p296 = scmp.ne.s32.totalorder %s291, %s293
    %p297 = scmp.eq.s32.totalorder %s21, 0
    %p298 = por %p296, %p297
    %p299 = scmp.ne.s32.totalorder %s291, %s293
    %p300 = scmp.eq.s32.totalorder %s26, 1
    %p301 = por %p299, %p300
    %p302 = scmp.ne.s32.totalorder %s293, %s294
    %p303 = scmp.eq.s32.totalorder %s26, 0
    %p304 = por %p302, %p303
    %p305 = scmp.ne.s32.totalorder %s293, %s294
    %p306 = scmp.eq.s32.totalorder %s27, 1
    %p307 = por %p305, %p306
    %p309 = scmp.ne.s32.totalorder %s294, %s308
    %p310 = scmp.eq.s32.totalorder %s27, 0
    %p311 = por %p309, %p310
    %s313 = sadd.s32 %s312, 1
    %p316 = scmp.eq.s32.totalorder %s21, 1
    %p317 = scmp.ne.s32.totalorder %s312, %s314
    %p318 = scmp.eq.s32.totalorder %s21, 0
    %p319 = por %p317, %p318
    %p320 = scmp.ne.s32.totalorder %s312, %s314
    %p321 = scmp.eq.s32.totalorder %s26, 1
    %p322 = por %p320, %p321
    %p323 = scmp.ne.s32.totalorder %s314, %s315
    %p324 = scmp.eq.s32.totalorder %s26, 0
    %p325 = por %p323, %p324
    %p326 = scmp.ne.s32.totalorder %s314, %s315
    %p327 = scmp.eq.s32.totalorder %s27, 1
    %p328 = por %p326, %p327
    %p330 = scmp.ne.s32.totalorder %s315, %s329
    %p331 = scmp.eq.s32.totalorder %s27, 0
    %p332 = por %p330, %p331
    %s334 = sadd.s32 %s333, 1
    %p337 = scmp.eq.s32.totalorder %s21, 1
    %p338 = scmp.ne.s32.totalorder %s333, %s335
    %p339 = scmp.eq.s32.totalorder %s21, 0
    %p340 = por %p338, %p339
    %p341 = scmp.ne.s32.totalorder %s333, %s335
    %p342 = scmp.eq.s32.totalorder %s26, 1
    %p343 = por %p341, %p342
    %p344 = scmp.ne.s32.totalorder %s335, %s336
    %p345 = scmp.eq.s32.totalorder %s26, 0
    %p346 = por %p344, %p345
    %p347 = scmp.ne.s32.totalorder %s335, %s336
    %p348 = scmp.eq.s32.totalorder %s27, 1
    %p349 = por %p347, %p348
    %p351 = scmp.ne.s32.totalorder %s336, %s350
    %p352 = scmp.eq.s32.totalorder %s27, 0
    %p353 = por %p351, %p352
    %s354 = ssub.s32 %s21, %s28
    %p355 = scmp.eq.s32.totalorder %s354, 0
    %s357 = sadd.s32 %s356, 1
    %s358 = scalar_select %p355, %s356, %s357
    %p361 = pneg %p355
    %p362 = scmp.eq.s32.totalorder %s21, 1
    %p363 = por %p361, %p362
    %p364 = scmp.ne.s32.totalorder %s356, %s359
    %p365 = scmp.eq.s32.totalorder %s21, 0
    %p366 = por %p364, %p365
    %p367 = scmp.ne.s32.totalorder %s356, %s359
    %p368 = scmp.eq.s32.totalorder %s26, 1
    %p369 = por %p367, %p368
    %p370 = scmp.ne.s32.totalorder %s359, %s360
    %p371 = scmp.eq.s32.totalorder %s26, 0
    %p372 = por %p370, %p371
    %p373 = scmp.ne.s32.totalorder %s359, %s360
    %p374 = scmp.eq.s32.totalorder %s27, 1
    %p375 = por %p373, %p374
    %p377 = scmp.ne.s32.totalorder %s360, %s376
    %p378 = scmp.eq.s32.totalorder %s27, 0
    %p379 = por %p377, %p378
    %p380 = scmp.le.s32.totalorder 1, %s21
    %p381 = scmp.lt.s32.totalorder %s21, 3
    %p382 = pnand %p380, %p381
    %p383 = pneg %p382
    // Predicated region
    $region9: #{asym_bi_cha_fuse_reduce.1} parent=5 // pred_check
      _
    $region10: #{asym_bi_cha_fuse_reduce.1} parent=5 // pred_check_branch
      %385 = sbr.rel (%p382) target = $region12
    $region11: #{asym_bi_cha_fuse_reduce.1} parent=5 // pred_region
      %s386 = ssub.s32 %s21, 1
      // Predicated region
      $region13: #{asym_bi_cha_fuse_reduce.1} parent=11 // pred_check
        %p387 = pneg %p94
      $region14: #{asym_bi_cha_fuse_reduce.1} parent=11 // pred_check_branch
        %389 = sbr.rel (%p387) target = $region16
      $region15: #{asym_bi_cha_fuse_reduce.1} parent=11 // pred_region
        _
      $region16: #{asym_bi_cha_fuse_reduce.1} parent=11 // pred_fallthru
        _
      // Predicated region
      $region17: #{asym_bi_cha_fuse_reduce.1} parent=11 // pred_check
        %p390 = pneg %p115
      $region18: #{asym_bi_cha_fuse_reduce.1} parent=11 // pred_check_branch
        %392 = sbr.rel (%p390) target = $region20
      $region19: #{asym_bi_cha_fuse_reduce.1} parent=11 // pred_region
        _
      $region20: #{asym_bi_cha_fuse_reduce.1} parent=11 // pred_fallthru
        _
      // Predicated region
      $region21: #{asym_bi_cha_fuse_reduce.1} parent=11 // pred_check
        %p393 = pneg %p136
      $region22: #{asym_bi_cha_fuse_reduce.1} parent=11 // pred_check_branch
        %395 = sbr.rel (%p393) target = $region24
      $region23: #{asym_bi_cha_fuse_reduce.1} parent=11 // pred_region
        _
      $region24: #{asym_bi_cha_fuse_reduce.1} parent=11 // pred_fallthru
        _
      // Predicated region
      $region25: #{asym_bi_cha_fuse_reduce.1} parent=11 // pred_check
        %p396 = pneg %p157
      $region26: #{asym_bi_cha_fuse_reduce.1} parent=11 // pred_check_branch
        %398 = sbr.rel (%p396) target = $region28
      $region27: #{asym_bi_cha_fuse_reduce.1} parent=11 // pred_region
        _
      $region28: #{asym_bi_cha_fuse_reduce.1} parent=11 // pred_fallthru
        _
      // Predicated region
      $region29: #{asym_bi_cha_fuse_reduce.1} parent=11 // pred_check
        %p399 = pneg %p178
      $region30: #{asym_bi_cha_fuse_reduce.1} parent=11 // pred_check_branch
        %401 = sbr.rel (%p399) target = $region32
      $region31: #{asym_bi_cha_fuse_reduce.1} parent=11 // pred_region
        _
      $region32: #{asym_bi_cha_fuse_reduce.1} parent=11 // pred_fallthru
        _
      // Predicated region
      $region33: #{asym_bi_cha_fuse_reduce.1} parent=11 // pred_check
        %p402 = pneg %p199
      $region34: #{asym_bi_cha_fuse_reduce.1} parent=11 // pred_check_branch
        %404 = sbr.rel (%p402) target = $region36
      $region35: #{asym_bi_cha_fuse_reduce.1} parent=11 // pred_region
        _
      $region36: #{asym_bi_cha_fuse_reduce.1} parent=11 // pred_fallthru
        _
      // Predicated region
      $region37: #{asym_bi_cha_fuse_reduce.1} parent=11 // pred_check
        %p405 = pneg %p220
      $region38: #{asym_bi_cha_fuse_reduce.1} parent=11 // pred_check_branch
        %407 = sbr.rel (%p405) target = $region40
      $region39: #{asym_bi_cha_fuse_reduce.1} parent=11 // pred_region
        _
      $region40: #{asym_bi_cha_fuse_reduce.1} parent=11 // pred_fallthru
        _
      // Predicated region
      $region41: #{asym_bi_cha_fuse_reduce.1} parent=11 // pred_check
        %p408 = pneg %p241
      $region42: #{asym_bi_cha_fuse_reduce.1} parent=11 // pred_check_branch
        %410 = sbr.rel (%p408) target = $region44
      $region43: #{asym_bi_cha_fuse_reduce.1} parent=11 // pred_region
        _
      $region44: #{asym_bi_cha_fuse_reduce.1} parent=11 // pred_fallthru
        _
      // Predicated region
      $region45: #{asym_bi_cha_fuse_reduce.1} parent=11 // pred_check
        %p411 = pneg %p262
      $region46: #{asym_bi_cha_fuse_reduce.1} parent=11 // pred_check_branch
        %413 = sbr.rel (%p411) target = $region48
      $region47: #{asym_bi_cha_fuse_reduce.1} parent=11 // pred_region
        _
      $region48: #{asym_bi_cha_fuse_reduce.1} parent=11 // pred_fallthru
        _
      // Predicated region
      $region49: #{asym_bi_cha_fuse_reduce.1} parent=11 // pred_check
        %p414 = pneg %p283
      $region50: #{asym_bi_cha_fuse_reduce.1} parent=11 // pred_check_branch
        %416 = sbr.rel (%p414) target = $region52
      $region51: #{asym_bi_cha_fuse_reduce.1} parent=11 // pred_region
        _
      $region52: #{asym_bi_cha_fuse_reduce.1} parent=11 // pred_fallthru
        _
      // Predicated region
      $region53: #{asym_bi_cha_fuse_reduce.1} parent=11 // pred_check
        %p417 = pneg %p304
      $region54: #{asym_bi_cha_fuse_reduce.1} parent=11 // pred_check_branch
        %419 = sbr.rel (%p417) target = $region56
      $region55: #{asym_bi_cha_fuse_reduce.1} parent=11 // pred_region
        _
      $region56: #{asym_bi_cha_fuse_reduce.1} parent=11 // pred_fallthru
        _
      // Predicated region
      $region57: #{asym_bi_cha_fuse_reduce.1} parent=11 // pred_check
        %p420 = pneg %p325
      $region58: #{asym_bi_cha_fuse_reduce.1} parent=11 // pred_check_branch
        %422 = sbr.rel (%p420) target = $region60
      $region59: #{asym_bi_cha_fuse_reduce.1} parent=11 // pred_region
        _
      $region60: #{asym_bi_cha_fuse_reduce.1} parent=11 // pred_fallthru
        _
      // Predicated region
      $region61: #{asym_bi_cha_fuse_reduce.1} parent=11 // pred_check
        %p423 = pneg %p346
      $region62: #{asym_bi_cha_fuse_reduce.1} parent=11 // pred_check_branch
        %425 = sbr.rel (%p423) target = $region64
      $region63: #{asym_bi_cha_fuse_reduce.1} parent=11 // pred_region
        _
      $region64: #{asym_bi_cha_fuse_reduce.1} parent=11 // pred_fallthru
        _
    $region12: #{asym_bi_cha_fuse_reduce.1} parent=5 // pred_fallthru
      _
    %p426 = scmp.lt.s32.totalorder %s21, 2
    // Predicated region
    $region65: #{asym_bi_cha_fuse_reduce.1} parent=5 // pred_check
      %p427 = pneg %p426
    $region66: #{asym_bi_cha_fuse_reduce.1} parent=5 // pred_check_branch
      %429 = sbr.rel (%p427) target = $region68
    $region67: #{asym_bi_cha_fuse_reduce.1} parent=5 // pred_region
      // Predicated region
      $region69: #{asym_bi_cha_fuse_reduce.1} parent=67 // pred_check
        %p430 = pneg %p41
      $region70: #{asym_bi_cha_fuse_reduce.1} parent=67 // pred_check_branch
        %432 = sbr.rel (%p430) target = $region72
      $region71: #{asym_bi_cha_fuse_reduce.1} parent=67 // pred_region
        %s433 = smul.u32 2, %s21
        %p434 = scmp.lt.s32.totalorder %s433, 3
        %s435 = scalar_select %p434, %s433, 3
        %s436 = smul.addr %s435, 4
        %s437 = scalar_lea.vmem %s0, %s436
        %s438 = smul.u32 2, %s21
      $region72: #{asym_bi_cha_fuse_reduce.1} parent=67 // pred_fallthru
        _
      // Predicated region
      $region73: #{asym_bi_cha_fuse_reduce.1} parent=67 // pred_check
        %p439 = pneg %p67
      $region74: #{asym_bi_cha_fuse_reduce.1} parent=67 // pred_check_branch
        %441 = sbr.rel (%p439) target = $region76
      $region75: #{asym_bi_cha_fuse_reduce.1} parent=67 // pred_region
        %s442 = smul.u32 2, %s21
        %p443 = scmp.lt.s32.totalorder %s442, 3
        %s444 = scalar_select %p443, %s442, 3
        %s445 = smul.addr %s444, 2
        %s446 = smul.addr %s445, 4
        %s447 = scalar_lea.vmem %s1, %s446
        %s448 = smul.u32 2, %s21
      $region76: #{asym_bi_cha_fuse_reduce.1} parent=67 // pred_fallthru
        _
    $region68: #{asym_bi_cha_fuse_reduce.1} parent=5 // pred_fallthru
      _
    %p449 = scmp.le.s32.totalorder 1, %s21
    %p450 = scmp.lt.s32.totalorder %s21, 3
    %p451 = pnand %p449, %p450
    %p452 = pneg %p451
    // Predicated region
    $region77: #{asym_bi_cha_fuse_reduce.1} parent=5 // pred_check
      _
    $region78: #{asym_bi_cha_fuse_reduce.1} parent=5 // pred_check_branch
      %454 = sbr.rel (%p451) target = $region80
    $region79: #{asym_bi_cha_fuse_reduce.1} parent=5 // pred_region
      %s455 = ssub.s32 %s21, 1
      %s456 = smul.u32 2, %s26
      %p457 = scmp.lt.s32.totalorder %s456, 3
      %s458 = scalar_select %p457, %s456, 3
      %s459 = smul.addr %s458, 4
      %s460 = scalar_lea.vmem %s0, %s459
      %p461 = pneg %p47
      %p462 = pneg %p44
      %s463 = smul.u32 2, %s26
      %p464 = scmp.lt.s32.totalorder %s463, 3
      %s465 = scalar_select %p464, %s463, 3
      %s466 = smul.addr %s465, 2
      %s467 = smul.addr %s466, 4
      %s468 = scalar_lea.vmem %s1, %s467
      %p469 = pneg %p73
      %p470 = pneg %p70
      %p471 = pneg %p94
      %p472 = pneg %p91
      %p473 = pneg %p115
      %p474 = pneg %p112
      %p475 = pneg %p136
      %p476 = pneg %p133
      %p477 = pneg %p157
      %p478 = pneg %p154
      %p479 = pneg %p178
      %p480 = pneg %p175
      %p481 = pneg %p199
      %p482 = pneg %p196
      %p483 = pneg %p220
      %p484 = pneg %p217
      %p485 = pneg %p241
      %p486 = pneg %p238
      %p487 = pneg %p262
      %p488 = pneg %p259
      %p489 = pneg %p283
      %p490 = pneg %p280
      %p491 = pneg %p304
      %p492 = pneg %p301
      %p493 = pneg %p325
      %p494 = pneg %p322
      %p495 = pneg %p346
      %p496 = pneg %p343
      %p497 = pneg %p372
      %p498 = pneg %p369
      %s499 = smul.u32 2, %s26
      %p500 = scmp.lt.s32.totalorder %s499, 3
      %s501 = scalar_select %p500, %s499, 3
      %s502 = smul.addr %s501, 2
      %s503 = smul.addr %s502, 8
      %s504 = scalar_lea.vmem %s15, %s503
      %s505 = smul.u32 2, %s26
      %p506 = scmp.lt.s32.totalorder %s505, 3
      %s507 = scalar_select %p506, %s505, 3
      %s508 = smul.addr %s507, 4
      %s509 = scalar_lea.vmem %s0, %s508
      %s510 = smul.u32 2, %s26
      %s511 = smul.u32 2, %s26
      %p512 = scmp.lt.s32.totalorder %s511, 3
      %s513 = scalar_select %p512, %s511, 3
      %s514 = smul.addr %s513, 2
      %s515 = smul.addr %s514, 4
      %s516 = scalar_lea.vmem %s1, %s515
      %s517 = smul.u32 2, %s26
      %s518 = smul.u32 2, %s26
      %p519 = scmp.lt.s32.totalorder %s518, 3
      %s520 = scalar_select %p519, %s518, 3
      %s521 = smul.addr %s520, 2
      %s522 = smul.addr %s521, 8
      %s523 = scalar_lea.vmem %s15, %s522
      %s524 = smul.u32 2, %s26
      %v526 = vld [vmem:[%s509] sm:$0xf]
      %v527 = vld [vmem:[%s509 + $0x4] sm:$0xf]
      %v528 = vld [vmem:[%s2] sm:$0xff]
      %v529 = vld [vmem:[%s2 + $0x8] sm:$0xff]
      %v530 = vld [vmem:[%s2 + $0x10] sm:$0xff]
      %v531 = vld [vmem:[%s2 + $0x18] sm:$0xff]
      %v532 = vld [vmem:[%s2 + $0x20] sm:$0xff]
      %v533 = vld [vmem:[%s2 + $0x28] sm:$0xff]
      %v534 = vld [vmem:[%s2 + $0x30] sm:$0xff]
      %v535 = vld [vmem:[%s2 + $0x38] sm:$0xff]
      %v536 = vld [vmem:[%s2 + $0x40] sm:$0xff]
      %v537 = vld [vmem:[%s2 + $0x48] sm:$0xff]
      %v538 = vld [vmem:[%s2 + $0x50] sm:$0xff]
      %v539 = vld [vmem:[%s2 + $0x58] sm:$0xff]
      %v540 = vld [vmem:[%s2 + $0x60] sm:$0xff]
      %v541 = vld [vmem:[%s2 + $0x68] sm:$0xff]
      %v542 = vld [vmem:[%s2 + $0x70] sm:$0xff]
      %v543 = vld [vmem:[%s2 + $0x78] sm:$0xff]
      %v544 = vld [vmem:[%s3] sm:$0x3]
      %v546 = vlaneseq
      %v547 = vshrl.u32 %v546, 7
      %v548 = vsub.s32 0, %v547
      %v549 = vrot.slane %v544, %v548
      %v550 = vlaneseq
      %v551 = vshrl.u32 %v550, 7
      %v552 = vsub.s32 1, %v551
      %v553 = vrot.slane %v544, %v552
      %v558 = vunpack.c.l.b16 %v526
      %v559 = vunpack.c.l.b16 %v527
      %v560 = vpack.c.b16 %v559, %v558
      %v578 = vunpack.c.l.b16 %v528
      %v579 = vunpack.c.h.b16 %v528
      %v580 = vunpack.c.l.b16 %v529
      %v581 = vunpack.c.h.b16 %v529
      %v582 = vunpack.c.l.b16 %v530
      %v583 = vunpack.c.h.b16 %v530
      %v584 = vunpack.c.l.b16 %v531
      %v585 = vunpack.c.h.b16 %v531
      %v586 = vunpack.c.l.b16 %v532
      %v587 = vunpack.c.h.b16 %v532
      %v588 = vunpack.c.l.b16 %v533
      %v589 = vunpack.c.h.b16 %v533
      %v590 = vunpack.c.l.b16 %v534
      %v591 = vunpack.c.h.b16 %v534
      %v592 = vunpack.c.l.b16 %v535
      %v593 = vunpack.c.h.b16 %v535
      %v594 = vunpack.c.l.b16 %v536
      %v595 = vunpack.c.h.b16 %v536
      %v596 = vunpack.c.l.b16 %v537
      %v597 = vunpack.c.h.b16 %v537
      %v598 = vunpack.c.l.b16 %v538
      %v599 = vunpack.c.h.b16 %v538
      %v600 = vunpack.c.l.b16 %v539
      %v601 = vunpack.c.h.b16 %v539
      %v602 = vunpack.c.l.b16 %v540
      %v603 = vunpack.c.h.b16 %v540
      %v604 = vunpack.c.l.b16 %v541
      %v605 = vunpack.c.h.b16 %v541
      %v606 = vunpack.c.l.b16 %v542
      %v607 = vunpack.c.h.b16 %v542
      %v608 = vunpack.c.l.b16 %v543
      %v609 = vunpack.c.h.b16 %v543
      %v610 = vpack.c.b16 %v580, %v578
      %v611 = vpack.c.b16 %v581, %v579
      %v612 = vpack.c.b16 %v584, %v582
      %v613 = vpack.c.b16 %v585, %v583
      %v614 = vpack.c.b16 %v588, %v586
      %v615 = vpack.c.b16 %v589, %v587
      %v616 = vpack.c.b16 %v592, %v590
      %v617 = vpack.c.b16 %v593, %v591
      %v618 = vpack.c.b16 %v596, %v594
      %v619 = vpack.c.b16 %v597, %v595
      %v620 = vpack.c.b16 %v600, %v598
      %v621 = vpack.c.b16 %v601, %v599
      %v622 = vpack.c.b16 %v604, %v602
      %v623 = vpack.c.b16 %v605, %v603
      %v624 = vpack.c.b16 %v608, %v606
      %v625 = vpack.c.b16 %v609, %v607
      %642 = vmatprep.subr.bf16.mxu0 %v625
      %643 = vmatpush1.bf16.msra.mxu0 %v624
      %644 = vmatprep.subr.bf16.mxu0 %v623
      %645 = vmatpush1.bf16.msra.mxu0 %v622
      %646 = vmatprep.subr.bf16.mxu0 %v621
      %647 = vmatpush1.bf16.msra.mxu0 %v620
      %648 = vmatprep.subr.bf16.mxu0 %v619
      %649 = vmatpush1.bf16.msra.mxu0 %v618
      %650 = vmatprep.subr.bf16.mxu0 %v617
      %651 = vmatpush1.bf16.msra.mxu0 %v616
      %652 = vmatprep.subr.bf16.mxu0 %v615
      %653 = vmatpush1.bf16.msra.mxu0 %v614
      %654 = vmatprep.subr.bf16.mxu0 %v613
      %655 = vmatpush1.bf16.msra.mxu0 %v612
      %656 = vmatprep.subr.bf16.mxu0 %v611
      %657 = vmatpush1.bf16.msra.mxu0 %v610
      %658 = vmatprep.subr.bf16.mxu0 0
      %659 = vmatpush2.bf16.msra.mxu0 0
      %660 = vmatprep.subr.bf16.mxu0 0
      %661 = vmatpush2.bf16.msra.mxu0 0
      %662 = vmatprep.subr.bf16.mxu0 0
      %663 = vmatpush2.bf16.msra.mxu0 0
      %664 = vmatprep.subr.bf16.mxu0 0
      %665 = vmatpush2.bf16.msra.mxu0 0
      %666 = vmatprep.subr.bf16.mxu0 0
      %667 = vmatpush2.bf16.msra.mxu0 0
      %668 = vmatprep.subr.bf16.mxu0 0
      %669 = vmatpush2.bf16.msra.mxu0 0
      %670 = vmatprep.subr.bf16.mxu0 0
      %671 = vmatpush2.bf16.msra.mxu0 0
      %672 = vmatprep.subr.bf16.mxu0 0
      %673 = vmatpush2.bf16.msra.mxu0 0
      %674 = vmatprep.mubr.bf16.mxu0 0
      %675 = vmatmul.mubr.bf16.gmra.mxu0 %v560
      %v676 = vpop.f32.mrf.mxu0
      %v677 = vadd.f32 %v549, %v676
      %v678 = vpop.f32.mrf.mxu0
      %v679 = vadd.f32 %v553, %v678
      %v680 = vpop.f32.mrf.mxu0
      %v681 = vadd.f32 %v549, %v680
      %v682 = vpop.f32.mrf.mxu0
      %v683 = vadd.f32 %v553, %v682
      %684 = vdwg.mxu0
      %v685 = vmax.f32 %v677, 0.0
      %v686 = vmax.f32 %v679, 0.0
      %v687 = vmax.f32 %v681, 0.0
      %v688 = vmax.f32 %v683, 0.0
      %v689 = vadd.f32 %v685, %v687
      %v690 = vrot.slane %v689, 4
      %v691 = vadd.f32 %v689, %v690
      %v692 = vrot.slane %v691, 2
      %v693 = vadd.f32 %v691, %v692
      %v694 = vrot.slane %v693, 1
      %v695 = vadd.f32 %v693, %v694
      %v696 = vadd.f32 %v686, %v688
      %v697 = vrot.slane %v696, 4
      %v698 = vadd.f32 %v696, %v697
      %v699 = vrot.slane %v698, 2
      %v700 = vadd.f32 %v698, %v699
      %v701 = vrot.slane %v700, 1
      %v702 = vadd.f32 %v700, %v701
      %v703 = vrcp.pop 16.0
      %v704 = vmul.f32 %v695, %v703
      %v705 = vmul.f32 %v702, %v703
      %v706 = vld [vmem:[%s4] sm:$0xff]
      %v707 = vld [vmem:[%s4 + $0x8] sm:$0xff]
      %v708 = vld [vmem:[%s4 + $0x10] sm:$0xff]
      %v709 = vld [vmem:[%s4 + $0x18] sm:$0xff]
      %v710 = vld [vmem:[%s4 + $0x20] sm:$0xff]
      %v711 = vld [vmem:[%s4 + $0x28] sm:$0xff]
      %v712 = vld [vmem:[%s4 + $0x30] sm:$0xff]
      %v713 = vld [vmem:[%s4 + $0x38] sm:$0xff]
      %v714 = vld [vmem:[%s4 + $0x40] sm:$0xff]
      %v715 = vld [vmem:[%s4 + $0x48] sm:$0xff]
      %v716 = vld [vmem:[%s4 + $0x50] sm:$0xff]
      %v717 = vld [vmem:[%s4 + $0x58] sm:$0xff]
      %v718 = vld [vmem:[%s4 + $0x60] sm:$0xff]
      %v719 = vld [vmem:[%s4 + $0x68] sm:$0xff]
      %v720 = vld [vmem:[%s4 + $0x70] sm:$0xff]
      %v721 = vld [vmem:[%s4 + $0x78] sm:$0xff]
      %v722 = vld [vmem:[%s4 + $0x80] sm:$0xff]
      %v723 = vld [vmem:[%s4 + $0x88] sm:$0xff]
      %v724 = vld [vmem:[%s4 + $0x90] sm:$0xff]
      %v725 = vld [vmem:[%s4 + $0x98] sm:$0xff]
      %v726 = vld [vmem:[%s4 + $0xa0] sm:$0xff]
      %v727 = vld [vmem:[%s4 + $0xa8] sm:$0xff]
      %v728 = vld [vmem:[%s4 + $0xb0] sm:$0xff]
      %v729 = vld [vmem:[%s4 + $0xb8] sm:$0xff]
      %v730 = vld [vmem:[%s4 + $0xc0] sm:$0xff]
      %v731 = vld [vmem:[%s4 + $0xc8] sm:$0xff]
      %v732 = vld [vmem:[%s4 + $0xd0] sm:$0xff]
      %v733 = vld [vmem:[%s4 + $0xd8] sm:$0xff]
      %v734 = vld [vmem:[%s4 + $0xe0] sm:$0xff]
      %v735 = vld [vmem:[%s4 + $0xe8] sm:$0xff]
      %v736 = vld [vmem:[%s4 + $0xf0] sm:$0xff]
      %v737 = vld [vmem:[%s4 + $0xf8] sm:$0xff]
      %738 = vmatprep.subr.mxu0 0.0
      %739 = vmatpush1.msra.mxu0 %v721
      %740 = vmatprep.subr.mxu0 0.0
      %741 = vmatpush1.msra.mxu0 %v720
      %742 = vmatprep.subr.mxu0 0.0
      %743 = vmatpush1.msra.mxu0 %v719
      %744 = vmatprep.subr.mxu0 0.0
      %745 = vmatpush1.msra.mxu0 %v718
      %746 = vmatprep.subr.mxu0 0.0
      %747 = vmatpush1.msra.mxu0 %v717
      %748 = vmatprep.subr.mxu0 0.0
      %749 = vmatpush1.msra.mxu0 %v716
      %750 = vmatprep.subr.mxu0 0.0
      %751 = vmatpush1.msra.mxu0 %v715
      %752 = vmatprep.subr.mxu0 0.0
      %753 = vmatpush1.msra.mxu0 %v714
      %754 = vmatprep.subr.mxu0 0.0
      %755 = vmatpush1.msra.mxu0 %v713
      %756 = vmatprep.subr.mxu0 0.0
      %757 = vmatpush1.msra.mxu0 %v712
      %758 = vmatprep.subr.mxu0 0.0
      %759 = vmatpush1.msra.mxu0 %v711
      %760 = vmatprep.subr.mxu0 0.0
      %761 = vmatpush1.msra.mxu0 %v710
      %762 = vmatprep.subr.mxu0 0.0
      %763 = vmatpush1.msra.mxu0 %v709
      %764 = vmatprep.subr.mxu0 0.0
      %765 = vmatpush1.msra.mxu0 %v708
      %766 = vmatprep.subr.mxu0 0.0
      %767 = vmatpush1.msra.mxu0 %v707
      %768 = vmatprep.subr.mxu0 0.0
      %769 = vmatpush1.msra.mxu0 %v706
      %770 = vmatprep.subr.mxu0 0.0
      %771 = vmatpush2.msra.mxu0 %v737
      %772 = vmatprep.subr.mxu0 0.0
      %773 = vmatpush2.msra.mxu0 %v736
      %774 = vmatprep.subr.mxu0 0.0
      %775 = vmatpush2.msra.mxu0 %v735
      %776 = vmatprep.subr.mxu0 0.0
      %777 = vmatpush2.msra.mxu0 %v734
      %778 = vmatprep.subr.mxu0 0.0
      %779 = vmatpush2.msra.mxu0 %v733
      %780 = vmatprep.subr.mxu0 0.0
      %781 = vmatpush2.msra.mxu0 %v732
      %782 = vmatprep.subr.mxu0 0.0
      %783 = vmatpush2.msra.mxu0 %v731
      %784 = vmatprep.subr.mxu0 0.0
      %785 = vmatpush2.msra.mxu0 %v730
      %786 = vmatprep.subr.mxu0 0.0
      %787 = vmatpush2.msra.mxu0 %v729
      %788 = vmatprep.subr.mxu0 0.0
      %789 = vmatpush2.msra.mxu0 %v728
      %790 = vmatprep.subr.mxu0 0.0
      %791 = vmatpush2.msra.mxu0 %v727
      %792 = vmatprep.subr.mxu0 0.0
      %793 = vmatpush2.msra.mxu0 %v726
      %794 = vmatprep.subr.mxu0 0.0
      %795 = vmatpush2.msra.mxu0 %v725
      %796 = vmatprep.subr.mxu0 0.0
      %797 = vmatpush2.msra.mxu0 %v724
      %798 = vmatprep.subr.mxu0 0.0
      %799 = vmatpush2.msra.mxu0 %v723
      %800 = vmatprep.subr.mxu0 0.0
      %801 = vmatpush2.msra.mxu0 %v722
      %802 = vmatprep.mubr.f32.mxu0 %v705
      %803 = vmatmul.mubr.f32.gmra.mxu0 %v704
      %v804 = vpop.f32.mrf.mxu0
      %v805 = vadd.f32 0.0, %v804
      %v806 = vpop.f32.mrf.mxu0
      %807 = vdwg.mxu0
      %v808 = vld [vmem:[%s5] sm:$0xff]
      %v809 = vld [vmem:[%s5 + $0x8] sm:$0xff]
      %v810 = vld [vmem:[%s6] sm:$0x1]
      %vm811 = vcmask 130048
      %v813 = vsel %vm811, %v805, 0
      %815 = vmatprep.subr.mxu0 0.0
      %816 = vmatpush1.msra.mxu0 0.0
      %817 = vmatprep.subr.mxu0 0.0
      %818 = vmatpush1.msra.mxu0 0.0
      %819 = vmatprep.subr.mxu0 0.0
      %820 = vmatpush1.msra.mxu0 0.0
      %821 = vmatprep.subr.mxu0 0.0
      %822 = vmatpush1.msra.mxu0 0.0
      %823 = vmatprep.subr.mxu0 0.0
      %824 = vmatpush1.msra.mxu0 0.0
      %825 = vmatprep.subr.mxu0 0.0
      %826 = vmatpush1.msra.mxu0 0.0
      %827 = vmatprep.subr.mxu0 0.0
      %828 = vmatpush1.msra.mxu0 0.0
      %829 = vmatprep.subr.mxu0 0.0
      %830 = vmatpush1.msra.mxu0 0.0
      %831 = vmatprep.subr.mxu0 0.0
      %832 = vmatpush1.msra.mxu0 0.0
      %833 = vmatprep.subr.mxu0 0.0
      %834 = vmatpush1.msra.mxu0 0.0
      %835 = vmatprep.subr.mxu0 0.0
      %836 = vmatpush1.msra.mxu0 0.0
      %837 = vmatprep.subr.mxu0 0.0
      %838 = vmatpush1.msra.mxu0 0.0
      %839 = vmatprep.subr.mxu0 0.0
      %840 = vmatpush1.msra.mxu0 0.0
      %841 = vmatprep.subr.mxu0 0.0
      %842 = vmatpush1.msra.mxu0 0.0
      %843 = vmatprep.subr.mxu0 0.0
      %844 = vmatpush1.msra.mxu0 %v809
      %845 = vmatprep.subr.mxu0 0.0
      %846 = vmatpush1.msra.mxu0 %v808
      %847 = vmatprep.subr.mxu0 0.0
      %848 = vmatpush2.msra.mxu0 0.0
      %849 = vmatprep.subr.mxu0 0.0
      %850 = vmatpush2.msra.mxu0 0.0
      %851 = vmatprep.subr.mxu0 0.0
      %852 = vmatpush2.msra.mxu0 0.0
      %853 = vmatprep.subr.mxu0 0.0
      %854 = vmatpush2.msra.mxu0 0.0
      %855 = vmatprep.subr.mxu0 0.0
      %856 = vmatpush2.msra.mxu0 0.0
      %857 = vmatprep.subr.mxu0 0.0
      %858 = vmatpush2.msra.mxu0 0.0
      %859 = vmatprep.subr.mxu0 0.0
      %860 = vmatpush2.msra.mxu0 0.0
      %861 = vmatprep.subr.mxu0 0.0
      %862 = vmatpush2.msra.mxu0 0.0
      %863 = vmatprep.subr.mxu0 0.0
      %864 = vmatpush2.msra.mxu0 0.0
      %865 = vmatprep.subr.mxu0 0.0
      %866 = vmatpush2.msra.mxu0 0.0
      %867 = vmatprep.subr.mxu0 0.0
      %868 = vmatpush2.msra.mxu0 0.0
      %869 = vmatprep.subr.mxu0 0.0
      %870 = vmatpush2.msra.mxu0 0.0
      %871 = vmatprep.subr.mxu0 0.0
      %872 = vmatpush2.msra.mxu0 0.0
      %873 = vmatprep.subr.mxu0 0.0
      %874 = vmatpush2.msra.mxu0 0.0
      %875 = vmatprep.subr.mxu0 0.0
      %876 = vmatpush2.msra.mxu0 0.0
      %877 = vmatprep.subr.mxu0 0.0
      %878 = vmatpush2.msra.mxu0 0.0
      %879 = vmatprep.mubr.f32.mxu0 0.0
      %880 = vmatmul.mubr.f32.gmra.mxu0 %v813
      %v881 = vpop.f32.mrf.mxu0
      %v882 = vadd.f32 %v810, %v881
      %v883 = vpop.f32.mrf.mxu0
      %884 = vdwg.mxu0
      %v885 = vmax.f32 %v882, 0.0
      %v886 = vld [vmem:[%s7] sm:$0xff]
      %v887 = vld [vmem:[%s8] sm:$0x3]
      %v889 = vcombine.high %v886, %v886
      %v891 = vlaneseq
      %v892 = vshrl.u32 %v891, 7
      %v893 = vsub.s32 0, %v892
      %v894 = vrot.slane %v887, %v893
      %v895 = vlaneseq
      %v896 = vshrl.u32 %v895, 7
      %v897 = vsub.s32 1, %v896
      %v898 = vrot.slane %v887, %v897
      %vm901 = vcmask 31744
      %v903 = vsel %vm901, %v885, 0
      %vm905 = vcmask 1043456
      %v906 = vsel %vm905, %v886, 0
      %v908 = vsel %vm905, %v889, 0
      %910 = vmatprep.subr.mxu0 0.0
      %911 = vmatpush1.msra.mxu0 0.0
      %912 = vmatprep.subr.mxu0 0.0
      %913 = vmatpush1.msra.mxu0 0.0
      %914 = vmatprep.subr.mxu0 0.0
      %915 = vmatpush1.msra.mxu0 0.0
      %916 = vmatprep.subr.mxu0 0.0
      %917 = vmatpush1.msra.mxu0 0.0
      %918 = vmatprep.subr.mxu0 0.0
      %919 = vmatpush1.msra.mxu0 0.0
      %920 = vmatprep.subr.mxu0 0.0
      %921 = vmatpush1.msra.mxu0 0.0
      %922 = vmatprep.subr.mxu0 0.0
      %923 = vmatpush1.msra.mxu0 0.0
      %924 = vmatprep.subr.mxu0 0.0
      %925 = vmatpush1.msra.mxu0 0.0
      %926 = vmatprep.subr.mxu0 0.0
      %927 = vmatpush1.msra.mxu0 0.0
      %928 = vmatprep.subr.mxu0 0.0
      %929 = vmatpush1.msra.mxu0 0.0
      %930 = vmatprep.subr.mxu0 0.0
      %931 = vmatpush1.msra.mxu0 0.0
      %932 = vmatprep.subr.mxu0 0.0
      %933 = vmatpush1.msra.mxu0 0.0
      %934 = vmatprep.subr.mxu0 0.0
      %935 = vmatpush1.msra.mxu0 0.0
      %936 = vmatprep.subr.mxu0 0.0
      %937 = vmatpush1.msra.mxu0 0.0
      %938 = vmatprep.subr.mxu0 0.0
      %939 = vmatpush1.msra.mxu0 0.0
      %940 = vmatprep.subr.mxu0 %v908
      %941 = vmatpush1.msra.mxu0 %v906
      %942 = vmatprep.subr.mxu0 0.0
      %943 = vmatpush2.msra.mxu0 0.0
      %944 = vmatprep.subr.mxu0 0.0
      %945 = vmatpush2.msra.mxu0 0.0
      %946 = vmatprep.subr.mxu0 0.0
      %947 = vmatpush2.msra.mxu0 0.0
      %948 = vmatprep.subr.mxu0 0.0
      %949 = vmatpush2.msra.mxu0 0.0
      %950 = vmatprep.subr.mxu0 0.0
      %951 = vmatpush2.msra.mxu0 0.0
      %952 = vmatprep.subr.mxu0 0.0
      %953 = vmatpush2.msra.mxu0 0.0
      %954 = vmatprep.subr.mxu0 0.0
      %955 = vmatpush2.msra.mxu0 0.0
      %956 = vmatprep.subr.mxu0 0.0
      %957 = vmatpush2.msra.mxu0 0.0
      %958 = vmatprep.subr.mxu0 0.0
      %959 = vmatpush2.msra.mxu0 0.0
      %960 = vmatprep.subr.mxu0 0.0
      %961 = vmatpush2.msra.mxu0 0.0
      %962 = vmatprep.subr.mxu0 0.0
      %963 = vmatpush2.msra.mxu0 0.0
      %964 = vmatprep.subr.mxu0 0.0
      %965 = vmatpush2.msra.mxu0 0.0
      %966 = vmatprep.subr.mxu0 0.0
      %967 = vmatpush2.msra.mxu0 0.0
      %968 = vmatprep.subr.mxu0 0.0
      %969 = vmatpush2.msra.mxu0 0.0
      %970 = vmatprep.subr.mxu0 0.0
      %971 = vmatpush2.msra.mxu0 0.0
      %972 = vmatprep.subr.mxu0 0.0
      %973 = vmatpush2.msra.mxu0 0.0
      %974 = vmatprep.mubr.f32.mxu0 0.0
      %975 = vmatmul.mubr.f32.gmra.mxu0 %v903
      %v976 = vpop.f32.mrf.mxu0
      %v977 = vadd.f32 %v894, %v976
      %v978 = vpop.f32.mrf.mxu0
      %v979 = vadd.f32 %v898, %v978
      %980 = vdwg.mxu0
      %v981 = vxor.u32 %v977, 2147483648
      %v982 = vxor.u32 %v979, 2147483648
      %v983 = vmul.f32 %v981, 1.442695
      %v984 = vpow.pop %v983
      %v985 = vmul.f32 %v982, 1.442695
      %v986 = vpow.pop %v985
      %v987 = vadd.f32 %v984, 1.0
      %v988 = vadd.f32 %v986, 1.0
      %v989 = vrcp.pop %v987
      %v990 = vmul.f32 1.0, %v989
      %v991 = vrcp.pop %v988
      %v992 = vmul.f32 1.0, %v991
      %v993 = vld [vmem:[%s516] sm:$0xff]
      %v994 = vld [vmem:[%s516 + $0x8] sm:$0xff]
      %v995 = vld [vmem:[%s9] sm:$0xf]
      %v996 = vld [vmem:[%s9 + $0x4] sm:$0xf]
      %v997 = vld [vmem:[%s9 + $0x8] sm:$0xf]
      %v998 = vld [vmem:[%s9 + $0xc] sm:$0xf]
      %v999 = vld [vmem:[%s9 + $0x10] sm:$0xf]
      %v1000 = vld [vmem:[%s9 + $0x14] sm:$0xf]
      %v1001 = vld [vmem:[%s9 + $0x18] sm:$0xf]
      %v1002 = vld [vmem:[%s9 + $0x1c] sm:$0xf]
      %v1003 = vld [vmem:[%s9 + $0x20] sm:$0xf]
      %v1004 = vld [vmem:[%s9 + $0x24] sm:$0xf]
      %v1005 = vld [vmem:[%s9 + $0x28] sm:$0xf]
      %v1006 = vld [vmem:[%s9 + $0x2c] sm:$0xf]
      %v1007 = vld [vmem:[%s9 + $0x30] sm:$0xf]
      %v1008 = vld [vmem:[%s9 + $0x34] sm:$0xf]
      %v1009 = vld [vmem:[%s9 + $0x38] sm:$0xf]
      %v1010 = vld [vmem:[%s9 + $0x3c] sm:$0xf]
      %v1011 = vld [vmem:[%s9 + $0x40] sm:$0xf]
      %v1012 = vld [vmem:[%s9 + $0x44] sm:$0xf]
      %v1013 = vld [vmem:[%s9 + $0x48] sm:$0xf]
      %v1014 = vld [vmem:[%s9 + $0x4c] sm:$0xf]
      %v1015 = vld [vmem:[%s9 + $0x50] sm:$0xf]
      %v1016 = vld [vmem:[%s9 + $0x54] sm:$0xf]
      %v1017 = vld [vmem:[%s9 + $0x58] sm:$0xf]
      %v1018 = vld [vmem:[%s9 + $0x5c] sm:$0xf]
      %v1019 = vld [vmem:[%s9 + $0x60] sm:$0xf]
      %v1020 = vld [vmem:[%s9 + $0x64] sm:$0xf]
      %v1021 = vld [vmem:[%s9 + $0x68] sm:$0xf]
      %v1022 = vld [vmem:[%s9 + $0x6c] sm:$0xf]
      %v1023 = vld [vmem:[%s9 + $0x70] sm:$0xf]
      %v1024 = vld [vmem:[%s9 + $0x74] sm:$0xf]
      %v1025 = vld [vmem:[%s9 + $0x78] sm:$0xf]
      %v1026 = vld [vmem:[%s9 + $0x7c] sm:$0xf]
      %v1027 = vld [vmem:[%s10] sm:$0x1]
      %v1029 = vlaneseq
      %v1030 = vshrl.u32 %v1029, 7
      %v1031 = vsub.s32 0, %v1030
      %v1032 = vrot.slane %v1027, %v1031
      %v1036 = vunpack.c.l.b16 %v993
      %v1037 = vunpack.c.h.b16 %v993
      %v1038 = vunpack.c.l.b16 %v994
      %v1039 = vunpack.c.h.b16 %v994
      %v1040 = vpack.c.b16 %v1038, %v1036
      %v1041 = vpack.c.b16 %v1039, %v1037
      %v1076 = vunpack.c.l.b16 %v995
      %v1077 = vunpack.c.l.b16 %v996
      %v1078 = vunpack.c.l.b16 %v997
      %v1079 = vunpack.c.l.b16 %v998
      %v1080 = vunpack.c.l.b16 %v999
      %v1081 = vunpack.c.l.b16 %v1000
      %v1082 = vunpack.c.l.b16 %v1001
      %v1083 = vunpack.c.l.b16 %v1002
      %v1084 = vunpack.c.l.b16 %v1003
      %v1085 = vunpack.c.l.b16 %v1004
      %v1086 = vunpack.c.l.b16 %v1005
      %v1087 = vunpack.c.l.b16 %v1006
      %v1088 = vunpack.c.l.b16 %v1007
      %v1089 = vunpack.c.l.b16 %v1008
      %v1090 = vunpack.c.l.b16 %v1009
      %v1091 = vunpack.c.l.b16 %v1010
      %v1092 = vunpack.c.l.b16 %v1011
      %v1093 = vunpack.c.l.b16 %v1012
      %v1094 = vunpack.c.l.b16 %v1013
      %v1095 = vunpack.c.l.b16 %v1014
      %v1096 = vunpack.c.l.b16 %v1015
      %v1097 = vunpack.c.l.b16 %v1016
      %v1098 = vunpack.c.l.b16 %v1017
      %v1099 = vunpack.c.l.b16 %v1018
      %v1100 = vunpack.c.l.b16 %v1019
      %v1101 = vunpack.c.l.b16 %v1020
      %v1102 = vunpack.c.l.b16 %v1021
      %v1103 = vunpack.c.l.b16 %v1022
      %v1104 = vunpack.c.l.b16 %v1023
      %v1105 = vunpack.c.l.b16 %v1024
      %v1106 = vunpack.c.l.b16 %v1025
      %v1107 = vunpack.c.l.b16 %v1026
      %v1108 = vpack.c.b16 %v1077, %v1076
      %v1109 = vpack.c.b16 %v1079, %v1078
      %v1110 = vpack.c.b16 %v1081, %v1080
      %v1111 = vpack.c.b16 %v1083, %v1082
      %v1112 = vpack.c.b16 %v1085, %v1084
      %v1113 = vpack.c.b16 %v1087, %v1086
      %v1114 = vpack.c.b16 %v1089, %v1088
      %v1115 = vpack.c.b16 %v1091, %v1090
      %v1116 = vpack.c.b16 %v1093, %v1092
      %v1117 = vpack.c.b16 %v1095, %v1094
      %v1118 = vpack.c.b16 %v1097, %v1096
      %v1119 = vpack.c.b16 %v1099, %v1098
      %v1120 = vpack.c.b16 %v1101, %v1100
      %v1121 = vpack.c.b16 %v1103, %v1102
      %v1122 = vpack.c.b16 %v1105, %v1104
      %v1123 = vpack.c.b16 %v1107, %v1106
      %1140 = vmatprep.subr.bf16.mxu0 0
      %1141 = vmatpush1.bf16.msra.mxu0 %v1115
      %1142 = vmatprep.subr.bf16.mxu0 0
      %1143 = vmatpush1.bf16.msra.mxu0 %v1114
      %1144 = vmatprep.subr.bf16.mxu0 0
      %1145 = vmatpush1.bf16.msra.mxu0 %v1113
      %1146 = vmatprep.subr.bf16.mxu0 0
      %1147 = vmatpush1.bf16.msra.mxu0 %v1112
      %1148 = vmatprep.subr.bf16.mxu0 0
      %1149 = vmatpush1.bf16.msra.mxu0 %v1111
      %1150 = vmatprep.subr.bf16.mxu0 0
      %1151 = vmatpush1.bf16.msra.mxu0 %v1110
      %1152 = vmatprep.subr.bf16.mxu0 0
      %1153 = vmatpush1.bf16.msra.mxu0 %v1109
      %1154 = vmatprep.subr.bf16.mxu0 0
      %1155 = vmatpush1.bf16.msra.mxu0 %v1108
      %1156 = vmatprep.subr.bf16.mxu0 0
      %1157 = vmatpush2.bf16.msra.mxu0 %v1123
      %1158 = vmatprep.subr.bf16.mxu0 0
      %1159 = vmatpush2.bf16.msra.mxu0 %v1122
      %1160 = vmatprep.subr.bf16.mxu0 0
      %1161 = vmatpush2.bf16.msra.mxu0 %v1121
      %1162 = vmatprep.subr.bf16.mxu0 0
      %1163 = vmatpush2.bf16.msra.mxu0 %v1120
      %1164 = vmatprep.subr.bf16.mxu0 0
      %1165 = vmatpush2.bf16.msra.mxu0 %v1119
      %1166 = vmatprep.subr.bf16.mxu0 0
      %1167 = vmatpush2.bf16.msra.mxu0 %v1118
      %1168 = vmatprep.subr.bf16.mxu0 0
      %1169 = vmatpush2.bf16.msra.mxu0 %v1117
      %1170 = vmatprep.subr.bf16.mxu0 0
      %1171 = vmatpush2.bf16.msra.mxu0 %v1116
      %1172 = vmatprep.mubr.bf16.mxu0 %v1041
      %1173 = vmatmul.mubr.bf16.gmra.mxu0 %v1040
      %v1174 = vpop.f32.mrf.mxu0
      %v1175 = vadd.f32 %v1032, %v1174
      %v1176 = vpop.f32.mrf.mxu0
      %v1177 = vpop.f32.mrf.mxu0
      %v1178 = vadd.f32 %v1032, %v1177
      %v1179 = vpop.f32.mrf.mxu0
      %1180 = vdwg.mxu0
      %v1181 = vmax.f32 %v1175, 0.0
      %v1182 = vmax.f32 %v1178, 0.0
      %v1183 = vpack.c.bf16 %v1182, %v1181
      %v1184 = vld [vmem:[%s11] sm:$0xff]
      %v1185 = vld [vmem:[%s11 + $0x8] sm:$0xff]
      %v1186 = vld [vmem:[%s11 + $0x10] sm:$0xff]
      %v1187 = vld [vmem:[%s11 + $0x18] sm:$0xff]
      %v1188 = vld [vmem:[%s11 + $0x20] sm:$0xff]
      %v1189 = vld [vmem:[%s11 + $0x28] sm:$0xff]
      %v1190 = vld [vmem:[%s11 + $0x30] sm:$0xff]
      %v1191 = vld [vmem:[%s11 + $0x38] sm:$0xff]
      %v1192 = vld [vmem:[%s12] sm:$0x3]
      %v1194 = vlaneseq
      %v1195 = vshrl.u32 %v1194, 7
      %v1196 = vsub.s32 0, %v1195
      %v1197 = vrot.slane %v1192, %v1196
      %v1198 = vlaneseq
      %v1199 = vshrl.u32 %v1198, 7
      %v1200 = vsub.s32 1, %v1199
      %v1201 = vrot.slane %v1192, %v1200
      %v1212 = vunpack.c.l.b16 %v1184
      %v1213 = vunpack.c.h.b16 %v1184
      %v1214 = vunpack.c.l.b16 %v1185
      %v1215 = vunpack.c.h.b16 %v1185
      %v1216 = vunpack.c.l.b16 %v1186
      %v1217 = vunpack.c.h.b16 %v1186
      %v1218 = vunpack.c.l.b16 %v1187
      %v1219 = vunpack.c.h.b16 %v1187
      %v1220 = vunpack.c.l.b16 %v1188
      %v1221 = vunpack.c.h.b16 %v1188
      %v1222 = vunpack.c.l.b16 %v1189
      %v1223 = vunpack.c.h.b16 %v1189
      %v1224 = vunpack.c.l.b16 %v1190
      %v1225 = vunpack.c.h.b16 %v1190
      %v1226 = vunpack.c.l.b16 %v1191
      %v1227 = vunpack.c.h.b16 %v1191
      %v1228 = vpack.c.b16 %v1214, %v1212
      %v1229 = vpack.c.b16 %v1215, %v1213
      %v1230 = vpack.c.b16 %v1218, %v1216
      %v1231 = vpack.c.b16 %v1219, %v1217
      %v1232 = vpack.c.b16 %v1222, %v1220
      %v1233 = vpack.c.b16 %v1223, %v1221
      %v1234 = vpack.c.b16 %v1226, %v1224
      %v1235 = vpack.c.b16 %v1227, %v1225
      %vm1244 = vcmask 523264
      %v1246 = vsel %vm1244, %v1183, 0
      %1248 = vmatprep.subr.bf16.mxu0 0
      %1249 = vmatpush1.bf16.msra.mxu0 0
      %1250 = vmatprep.subr.bf16.mxu0 0
      %1251 = vmatpush1.bf16.msra.mxu0 0
      %1252 = vmatprep.subr.bf16.mxu0 0
      %1253 = vmatpush1.bf16.msra.mxu0 0
      %1254 = vmatprep.subr.bf16.mxu0 0
      %1255 = vmatpush1.bf16.msra.mxu0 0
      %1256 = vmatprep.subr.bf16.mxu0 %v1235
      %1257 = vmatpush1.bf16.msra.mxu0 %v1234
      %1258 = vmatprep.subr.bf16.mxu0 %v1233
      %1259 = vmatpush1.bf16.msra.mxu0 %v1232
      %1260 = vmatprep.subr.bf16.mxu0 %v1231
      %1261 = vmatpush1.bf16.msra.mxu0 %v1230
      %1262 = vmatprep.subr.bf16.mxu0 %v1229
      %1263 = vmatpush1.bf16.msra.mxu0 %v1228
      %1264 = vmatprep.subr.bf16.mxu0 0
      %1265 = vmatpush2.bf16.msra.mxu0 0
      %1266 = vmatprep.subr.bf16.mxu0 0
      %1267 = vmatpush2.bf16.msra.mxu0 0
      %1268 = vmatprep.subr.bf16.mxu0 0
      %1269 = vmatpush2.bf16.msra.mxu0 0
      %1270 = vmatprep.subr.bf16.mxu0 0
      %1271 = vmatpush2.bf16.msra.mxu0 0
      %1272 = vmatprep.subr.bf16.mxu0 0
      %1273 = vmatpush2.bf16.msra.mxu0 0
      %1274 = vmatprep.subr.bf16.mxu0 0
      %1275 = vmatpush2.bf16.msra.mxu0 0
      %1276 = vmatprep.subr.bf16.mxu0 0
      %1277 = vmatpush2.bf16.msra.mxu0 0
      %1278 = vmatprep.subr.bf16.mxu0 0
      %1279 = vmatpush2.bf16.msra.mxu0 0
      %1280 = vmatprep.mubr.bf16.mxu0 0
      %1281 = vmatmul.mubr.bf16.gmra.mxu0 %v1246
      %v1282 = vpop.f32.mrf.mxu0
      %v1283 = vadd.f32 %v1197, %v1282
      %v1284 = vpop.f32.mrf.mxu0
      %v1285 = vadd.f32 %v1201, %v1284
      %v1286 = vpop.f32.mrf.mxu0
      %v1287 = vadd.f32 %v1197, %v1286
      %v1288 = vpop.f32.mrf.mxu0
      %v1289 = vadd.f32 %v1201, %v1288
      %1290 = vdwg.mxu0
      %v1291 = vxor.u32 %v1283, 2147483648
      %v1292 = vxor.u32 %v1285, 2147483648
      %v1293 = vxor.u32 %v1287, 2147483648
      %v1294 = vxor.u32 %v1289, 2147483648
      %v1295 = vmul.f32 %v1291, 1.442695
      %v1296 = vpow.pop %v1295
      %v1297 = vmul.f32 %v1292, 1.442695
      %v1298 = vpow.pop %v1297
      %v1299 = vmul.f32 %v1293, 1.442695
      %v1300 = vpow.pop %v1299
      %v1301 = vmul.f32 %v1294, 1.442695
      %v1302 = vpow.pop %v1301
      %v1303 = vadd.f32 %v1296, 1.0
      %v1304 = vadd.f32 %v1298, 1.0
      %v1305 = vadd.f32 %v1300, 1.0
      %v1306 = vadd.f32 %v1302, 1.0
      %v1307 = vrcp.pop %v1303
      %v1308 = vmul.f32 1.0, %v1307
      %v1309 = vrcp.pop %v1304
      %v1310 = vmul.f32 1.0, %v1309
      %v1311 = vrcp.pop %v1305
      %v1312 = vmul.f32 1.0, %v1311
      %v1313 = vrcp.pop %v1306
      %v1314 = vmul.f32 1.0, %v1313
      %v1315 = vunpack.c.l.bf16 %v993
      %v1316 = vunpack.c.h.bf16 %v993
      %v1317 = vunpack.c.l.bf16 %v994
      %v1318 = vunpack.c.h.bf16 %v994
      %v1319 = vlaneseq
      %v1320 = vshrl.u32 %v1319, 7
      %v1321 = vsub.s32 0, %v1320
      %v1322 = vrot.slane %v990, %v1321
      %v1323 = vlaneseq
      %v1324 = vshrl.u32 %v1323, 7
      %v1325 = vsub.s32 0, %v1324
      %v1326 = vrot.slane %v992, %v1325
      %v1327 = vmul.f32 %v1315, %v1322
      %v1328 = vmul.f32 %v1316, %v1326
      %v1329 = vmul.f32 %v1317, %v1322
      %v1330 = vmul.f32 %v1318, %v1326
      %v1331 = vmul.f32 %v685, %v1308
      %v1332 = vmul.f32 %v686, %v1310
      %v1333 = vmul.f32 %v687, %v1312
      %v1334 = vmul.f32 %v688, %v1314
      %v1335 = vadd.f32 %v1327, %v1331
      %v1336 = vadd.f32 %v1328, %v1332
      %v1337 = vadd.f32 %v1329, %v1333
      %v1338 = vadd.f32 %v1330, %v1334
      %v1339 = vpack.c.bf16 %v1337, %v1335
      %v1340 = vpack.c.bf16 %v1338, %v1336
      %vm1345 = vcmask 1040384
      %v1346 = vrot.slane %v1335, 7
      %v1347 = vrot.slane %v1336, 7
      %v1348 = vrot.slane %v1337, 7
      %v1349 = vsel %vm1345, %v1346, %v1348
      %v1350 = vrot.slane %v1338, 7
      %v1351 = vsel %vm1345, %v1347, %v1350
      %v1356 = vsel %vm1345, 0.0, %v1346
      %v1357 = vsel %vm1345, 0.0, %v1347
      %v1358 = vpack.c.bf16 %v1349, %v1356
      %v1359 = vpack.c.bf16 %v1351, %v1357
      %vm1360 = vcmask 1046528
      %v1361 = vrot.slane %v1335, 1
      %v1362 = vrot.slane %v1337, 1
      %v1363 = vsel %vm1360, %v1361, %v1362
      %v1364 = vrot.slane %v1336, 1
      %v1365 = vrot.slane %v1338, 1
      %v1366 = vsel %vm1360, %v1364, %v1365
      %v1371 = vsel %vm1360, %v1362, 0.0
      %v1372 = vsel %vm1360, %v1365, 0.0
      %v1373 = vpack.c.bf16 %v1371, %v1363
      %v1374 = vpack.c.bf16 %v1372, %v1366
      %v1375 = vld [vmem:[%s13] sm:$0xff]
      %v1376 = vld [vmem:[%s13 + $0x8] sm:$0xff]
      %v1377 = vld [vmem:[%s13 + $0x10] sm:$0xff]
      %v1378 = vld [vmem:[%s13 + $0x18] sm:$0xff]
      %v1379 = vld [vmem:[%s13 + $0x20] sm:$0xff]
      %v1380 = vld [vmem:[%s13 + $0x28] sm:$0xff]
      %v1381 = vld [vmem:[%s13 + $0x30] sm:$0xff]
      %v1382 = vld [vmem:[%s13 + $0x38] sm:$0xff]
      %v1383 = vld [vmem:[%s13 + $0x40] sm:$0xff]
      %v1384 = vld [vmem:[%s13 + $0x48] sm:$0xff]
      %v1385 = vld [vmem:[%s13 + $0x50] sm:$0xff]
      %v1386 = vld [vmem:[%s13 + $0x58] sm:$0xff]
      %v1387 = vld [vmem:[%s13 + $0x60] sm:$0xff]
      %v1388 = vld [vmem:[%s13 + $0x68] sm:$0xff]
      %v1389 = vld [vmem:[%s13 + $0x70] sm:$0xff]
      %v1390 = vld [vmem:[%s13 + $0x78] sm:$0xff]
      %v1391 = vld [vmem:[%s13 + $0x80] sm:$0xff]
      %v1392 = vld [vmem:[%s13 + $0x88] sm:$0xff]
      %v1393 = vld [vmem:[%s13 + $0x90] sm:$0xff]
      %v1394 = vld [vmem:[%s13 + $0x98] sm:$0xff]
      %v1395 = vld [vmem:[%s13 + $0xa0] sm:$0xff]
      %v1396 = vld [vmem:[%s13 + $0xa8] sm:$0xff]
      %v1397 = vld [vmem:[%s13 + $0xb0] sm:$0xff]
      %v1398 = vld [vmem:[%s13 + $0xb8] sm:$0xff]
      %v1399 = vld [vmem:[%s13 + $0xc0] sm:$0xff]
      %v1400 = vld [vmem:[%s13 + $0xc8] sm:$0xff]
      %v1401 = vld [vmem:[%s13 + $0xd0] sm:$0xff]
      %v1402 = vld [vmem:[%s13 + $0xd8] sm:$0xff]
      %v1403 = vld [vmem:[%s13 + $0xe0] sm:$0xff]
      %v1404 = vld [vmem:[%s13 + $0xe8] sm:$0xff]
      %v1405 = vld [vmem:[%s13 + $0xf0] sm:$0xff]
      %v1406 = vld [vmem:[%s13 + $0xf8] sm:$0xff]
      %v1407 = vld [vmem:[%s13 + $0x100] sm:$0xff]
      %v1408 = vld [vmem:[%s13 + $0x108] sm:$0xff]
      %v1409 = vld [vmem:[%s13 + $0x110] sm:$0xff]
      %v1410 = vld [vmem:[%s13 + $0x118] sm:$0xff]
      %v1411 = vld [vmem:[%s13 + $0x120] sm:$0xff]
      %v1412 = vld [vmem:[%s13 + $0x128] sm:$0xff]
      %v1413 = vld [vmem:[%s13 + $0x130] sm:$0xff]
      %v1414 = vld [vmem:[%s13 + $0x138] sm:$0xff]
      %v1415 = vld [vmem:[%s13 + $0x140] sm:$0xff]
      %v1416 = vld [vmem:[%s13 + $0x148] sm:$0xff]
      %v1417 = vld [vmem:[%s13 + $0x150] sm:$0xff]
      %v1418 = vld [vmem:[%s13 + $0x158] sm:$0xff]
      %v1419 = vld [vmem:[%s13 + $0x160] sm:$0xff]
      %v1420 = vld [vmem:[%s13 + $0x168] sm:$0xff]
      %v1421 = vld [vmem:[%s13 + $0x170] sm:$0xff]
      %v1422 = vld [vmem:[%s13 + $0x178] sm:$0xff]
      %v1423 = vld [vmem:[%s13 + $0x180] sm:$0xff]
      %v1424 = vld [vmem:[%s13 + $0x188] sm:$0xff]
      %v1425 = vld [vmem:[%s13 + $0x190] sm:$0xff]
      %v1426 = vld [vmem:[%s13 + $0x198] sm:$0xff]
      %v1427 = vld [vmem:[%s13 + $0x1a0] sm:$0xff]
      %v1428 = vld [vmem:[%s13 + $0x1a8] sm:$0xff]
      %v1429 = vld [vmem:[%s13 + $0x1b0] sm:$0xff]
      %v1430 = vld [vmem:[%s13 + $0x1b8] sm:$0xff]
      %v1431 = vld [vmem:[%s13 + $0x1c0] sm:$0xff]
      %v1432 = vld [vmem:[%s13 + $0x1c8] sm:$0xff]
      %v1433 = vld [vmem:[%s13 + $0x1d0] sm:$0xff]
      %v1434 = vld [vmem:[%s13 + $0x1d8] sm:$0xff]
      %v1435 = vld [vmem:[%s13 + $0x1e0] sm:$0xff]
      %v1436 = vld [vmem:[%s13 + $0x1e8] sm:$0xff]
      %v1437 = vld [vmem:[%s13 + $0x1f0] sm:$0xff]
      %v1438 = vld [vmem:[%s13 + $0x1f8] sm:$0xff]
      %v1439 = vld [vmem:[%s13 + $0x200] sm:$0xff]
      %v1440 = vld [vmem:[%s13 + $0x208] sm:$0xff]
      %v1441 = vld [vmem:[%s13 + $0x210] sm:$0xff]
      %v1442 = vld [vmem:[%s13 + $0x218] sm:$0xff]
      %v1443 = vld [vmem:[%s13 + $0x220] sm:$0xff]
      %v1444 = vld [vmem:[%s13 + $0x228] sm:$0xff]
      %v1445 = vld [vmem:[%s13 + $0x230] sm:$0xff]
      %v1446 = vld [vmem:[%s13 + $0x238] sm:$0xff]
      %v1447 = vld [vmem:[%s13 + $0x240] sm:$0xff]
      %v1448 = vld [vmem:[%s13 + $0x248] sm:$0xff]
      %v1449 = vld [vmem:[%s13 + $0x250] sm:$0xff]
      %v1450 = vld [vmem:[%s13 + $0x258] sm:$0xff]
      %v1451 = vld [vmem:[%s13 + $0x260] sm:$0xff]
      %v1452 = vld [vmem:[%s13 + $0x268] sm:$0xff]
      %v1453 = vld [vmem:[%s13 + $0x270] sm:$0xff]
      %v1454 = vld [vmem:[%s13 + $0x278] sm:$0xff]
      %v1455 = vld [vmem:[%s13 + $0x280] sm:$0xff]
      %v1456 = vld [vmem:[%s13 + $0x288] sm:$0xff]
      %v1457 = vld [vmem:[%s13 + $0x290] sm:$0xff]
      %v1458 = vld [vmem:[%s13 + $0x298] sm:$0xff]
      %v1459 = vld [vmem:[%s13 + $0x2a0] sm:$0xff]
      %v1460 = vld [vmem:[%s13 + $0x2a8] sm:$0xff]
      %v1461 = vld [vmem:[%s13 + $0x2b0] sm:$0xff]
      %v1462 = vld [vmem:[%s13 + $0x2b8] sm:$0xff]
      %v1463 = vld [vmem:[%s13 + $0x2c0] sm:$0xff]
      %v1464 = vld [vmem:[%s13 + $0x2c8] sm:$0xff]
      %v1465 = vld [vmem:[%s13 + $0x2d0] sm:$0xff]
      %v1466 = vld [vmem:[%s13 + $0x2d8] sm:$0xff]
      %v1467 = vld [vmem:[%s13 + $0x2e0] sm:$0xff]
      %v1468 = vld [vmem:[%s13 + $0x2e8] sm:$0xff]
      %v1469 = vld [vmem:[%s13 + $0x2f0] sm:$0xff]
      %v1470 = vld [vmem:[%s13 + $0x2f8] sm:$0xff]
      %v1471 = vld [vmem:[%s14] sm:$0x3]
      %v1473 = vlaneseq
      %v1474 = vshrl.u32 %v1473, 7
      %v1475 = vsub.s32 0, %v1474
      %v1476 = vrot.slane %v1471, %v1475
      %v1477 = vlaneseq
      %v1478 = vshrl.u32 %v1477, 7
      %v1479 = vsub.s32 1, %v1478
      %v1480 = vrot.slane %v1471, %v1479
      %v1579 = vunpack.c.l.b16 %v1375
      %v1580 = vunpack.c.h.b16 %v1375
      %v1581 = vunpack.c.l.b16 %v1376
      %v1582 = vunpack.c.h.b16 %v1376
      %v1583 = vunpack.c.l.b16 %v1377
      %v1584 = vunpack.c.h.b16 %v1377
      %v1585 = vunpack.c.l.b16 %v1378
      %v1586 = vunpack.c.h.b16 %v1378
      %v1587 = vunpack.c.l.b16 %v1379
      %v1588 = vunpack.c.h.b16 %v1379
      %v1589 = vunpack.c.l.b16 %v1380
      %v1590 = vunpack.c.h.b16 %v1380
      %v1591 = vunpack.c.l.b16 %v1381
      %v1592 = vunpack.c.h.b16 %v1381
      %v1593 = vunpack.c.l.b16 %v1382
      %v1594 = vunpack.c.h.b16 %v1382
      %v1595 = vunpack.c.l.b16 %v1383
      %v1596 = vunpack.c.h.b16 %v1383
      %v1597 = vunpack.c.l.b16 %v1384
      %v1598 = vunpack.c.h.b16 %v1384
      %v1599 = vunpack.c.l.b16 %v1385
      %v1600 = vunpack.c.h.b16 %v1385
      %v1601 = vunpack.c.l.b16 %v1386
      %v1602 = vunpack.c.h.b16 %v1386
      %v1603 = vunpack.c.l.b16 %v1387
      %v1604 = vunpack.c.h.b16 %v1387
      %v1605 = vunpack.c.l.b16 %v1388
      %v1606 = vunpack.c.h.b16 %v1388
      %v1607 = vunpack.c.l.b16 %v1389
      %v1608 = vunpack.c.h.b16 %v1389
      %v1609 = vunpack.c.l.b16 %v1390
      %v1610 = vunpack.c.h.b16 %v1390
      %v1611 = vunpack.c.l.b16 %v1391
      %v1612 = vunpack.c.h.b16 %v1391
      %v1613 = vunpack.c.l.b16 %v1392
      %v1614 = vunpack.c.h.b16 %v1392
      %v1615 = vunpack.c.l.b16 %v1393
      %v1616 = vunpack.c.h.b16 %v1393
      %v1617 = vunpack.c.l.b16 %v1394
      %v1618 = vunpack.c.h.b16 %v1394
      %v1619 = vunpack.c.l.b16 %v1395
      %v1620 = vunpack.c.h.b16 %v1395
      %v1621 = vunpack.c.l.b16 %v1396
      %v1622 = vunpack.c.h.b16 %v1396
      %v1623 = vunpack.c.l.b16 %v1397
      %v1624 = vunpack.c.h.b16 %v1397
      %v1625 = vunpack.c.l.b16 %v1398
      %v1626 = vunpack.c.h.b16 %v1398
      %v1627 = vunpack.c.l.b16 %v1399
      %v1628 = vunpack.c.h.b16 %v1399
      %v1629 = vunpack.c.l.b16 %v1400
      %v1630 = vunpack.c.h.b16 %v1400
      %v1631 = vunpack.c.l.b16 %v1401
      %v1632 = vunpack.c.h.b16 %v1401
      %v1633 = vunpack.c.l.b16 %v1402
      %v1634 = vunpack.c.h.b16 %v1402
      %v1635 = vunpack.c.l.b16 %v1403
      %v1636 = vunpack.c.h.b16 %v1403
      %v1637 = vunpack.c.l.b16 %v1404
      %v1638 = vunpack.c.h.b16 %v1404
      %v1639 = vunpack.c.l.b16 %v1405
      %v1640 = vunpack.c.h.b16 %v1405
      %v1641 = vunpack.c.l.b16 %v1406
      %v1642 = vunpack.c.h.b16 %v1406
      %v1643 = vunpack.c.l.b16 %v1407
      %v1644 = vunpack.c.h.b16 %v1407
      %v1645 = vunpack.c.l.b16 %v1408
      %v1646 = vunpack.c.h.b16 %v1408
      %v1647 = vunpack.c.l.b16 %v1409
      %v1648 = vunpack.c.h.b16 %v1409
      %v1649 = vunpack.c.l.b16 %v1410
      %v1650 = vunpack.c.h.b16 %v1410
      %v1651 = vunpack.c.l.b16 %v1411
      %v1652 = vunpack.c.h.b16 %v1411
      %v1653 = vunpack.c.l.b16 %v1412
      %v1654 = vunpack.c.h.b16 %v1412
      %v1655 = vunpack.c.l.b16 %v1413
      %v1656 = vunpack.c.h.b16 %v1413
      %v1657 = vunpack.c.l.b16 %v1414
      %v1658 = vunpack.c.h.b16 %v1414
      %v1659 = vunpack.c.l.b16 %v1415
      %v1660 = vunpack.c.h.b16 %v1415
      %v1661 = vunpack.c.l.b16 %v1416
      %v1662 = vunpack.c.h.b16 %v1416
      %v1663 = vunpack.c.l.b16 %v1417
      %v1664 = vunpack.c.h.b16 %v1417
      %v1665 = vunpack.c.l.b16 %v1418
      %v1666 = vunpack.c.h.b16 %v1418
      %v1667 = vunpack.c.l.b16 %v1419
      %v1668 = vunpack.c.h.b16 %v1419
      %v1669 = vunpack.c.l.b16 %v1420
      %v1670 = vunpack.c.h.b16 %v1420
      %v1671 = vunpack.c.l.b16 %v1421
      %v1672 = vunpack.c.h.b16 %v1421
      %v1673 = vunpack.c.l.b16 %v1422
      %v1674 = vunpack.c.h.b16 %v1422
      %v1675 = vunpack.c.l.b16 %v1423
      %v1676 = vunpack.c.h.b16 %v1423
      %v1677 = vunpack.c.l.b16 %v1424
      %v1678 = vunpack.c.h.b16 %v1424
      %v1679 = vunpack.c.l.b16 %v1425
      %v1680 = vunpack.c.h.b16 %v1425
      %v1681 = vunpack.c.l.b16 %v1426
      %v1682 = vunpack.c.h.b16 %v1426
      %v1683 = vunpack.c.l.b16 %v1427
      %v1684 = vunpack.c.h.b16 %v1427
      %v1685 = vunpack.c.l.b16 %v1428
      %v1686 = vunpack.c.h.b16 %v1428
      %v1687 = vunpack.c.l.b16 %v1429
      %v1688 = vunpack.c.h.b16 %v1429
      %v1689 = vunpack.c.l.b16 %v1430
      %v1690 = vunpack.c.h.b16 %v1430
      %v1691 = vunpack.c.l.b16 %v1431
      %v1692 = vunpack.c.h.b16 %v1431
      %v1693 = vunpack.c.l.b16 %v1432
      %v1694 = vunpack.c.h.b16 %v1432
      %v1695 = vunpack.c.l.b16 %v1433
      %v1696 = vunpack.c.h.b16 %v1433
      %v1697 = vunpack.c.l.b16 %v1434
      %v1698 = vunpack.c.h.b16 %v1434
      %v1699 = vunpack.c.l.b16 %v1435
      %v1700 = vunpack.c.h.b16 %v1435
      %v1701 = vunpack.c.l.b16 %v1436
      %v1702 = vunpack.c.h.b16 %v1436
      %v1703 = vunpack.c.l.b16 %v1437
      %v1704 = vunpack.c.h.b16 %v1437
      %v1705 = vunpack.c.l.b16 %v1438
      %v1706 = vunpack.c.h.b16 %v1438
      %v1707 = vunpack.c.l.b16 %v1439
      %v1708 = vunpack.c.h.b16 %v1439
      %v1709 = vunpack.c.l.b16 %v1440
      %v1710 = vunpack.c.h.b16 %v1440
      %v1711 = vunpack.c.l.b16 %v1441
      %v1712 = vunpack.c.h.b16 %v1441
      %v1713 = vunpack.c.l.b16 %v1442
      %v1714 = vunpack.c.h.b16 %v1442
      %v1715 = vunpack.c.l.b16 %v1443
      %v1716 = vunpack.c.h.b16 %v1443
      %v1717 = vunpack.c.l.b16 %v1444
      %v1718 = vunpack.c.h.b16 %v1444
      %v1719 = vunpack.c.l.b16 %v1445
      %v1720 = vunpack.c.h.b16 %v1445
      %v1721 = vunpack.c.l.b16 %v1446
      %v1722 = vunpack.c.h.b16 %v1446
      %v1723 = vunpack.c.l.b16 %v1447
      %v1724 = vunpack.c.h.b16 %v1447
      %v1725 = vunpack.c.l.b16 %v1448
      %v1726 = vunpack.c.h.b16 %v1448
      %v1727 = vunpack.c.l.b16 %v1449
      %v1728 = vunpack.c.h.b16 %v1449
      %v1729 = vunpack.c.l.b16 %v1450
      %v1730 = vunpack.c.h.b16 %v1450
      %v1731 = vunpack.c.l.b16 %v1451
      %v1732 = vunpack.c.h.b16 %v1451
      %v1733 = vunpack.c.l.b16 %v1452
      %v1734 = vunpack.c.h.b16 %v1452
      %v1735 = vunpack.c.l.b16 %v1453
      %v1736 = vunpack.c.h.b16 %v1453
      %v1737 = vunpack.c.l.b16 %v1454
      %v1738 = vunpack.c.h.b16 %v1454
      %v1739 = vunpack.c.l.b16 %v1455
      %v1740 = vunpack.c.h.b16 %v1455
      %v1741 = vunpack.c.l.b16 %v1456
      %v1742 = vunpack.c.h.b16 %v1456
      %v1743 = vunpack.c.l.b16 %v1457
      %v1744 = vunpack.c.h.b16 %v1457
      %v1745 = vunpack.c.l.b16 %v1458
      %v1746 = vunpack.c.h.b16 %v1458
      %v1747 = vunpack.c.l.b16 %v1459
      %v1748 = vunpack.c.h.b16 %v1459
      %v1749 = vunpack.c.l.b16 %v1460
      %v1750 = vunpack.c.h.b16 %v1460
      %v1751 = vunpack.c.l.b16 %v1461
      %v1752 = vunpack.c.h.b16 %v1461
      %v1753 = vunpack.c.l.b16 %v1462
      %v1754 = vunpack.c.h.b16 %v1462
      %v1755 = vunpack.c.l.b16 %v1463
      %v1756 = vunpack.c.h.b16 %v1463
      %v1757 = vunpack.c.l.b16 %v1464
      %v1758 = vunpack.c.h.b16 %v1464
      %v1759 = vunpack.c.l.b16 %v1465
      %v1760 = vunpack.c.h.b16 %v1465
      %v1761 = vunpack.c.l.b16 %v1466
      %v1762 = vunpack.c.h.b16 %v1466
      %v1763 = vunpack.c.l.b16 %v1467
      %v1764 = vunpack.c.h.b16 %v1467
      %v1765 = vunpack.c.l.b16 %v1468
      %v1766 = vunpack.c.h.b16 %v1468
      %v1767 = vunpack.c.l.b16 %v1469
      %v1768 = vunpack.c.h.b16 %v1469
      %v1769 = vunpack.c.l.b16 %v1470
      %v1770 = vunpack.c.h.b16 %v1470
      %v1771 = vpack.c.b16 %v1581, %v1579
      %v1772 = vpack.c.b16 %v1582, %v1580
      %v1773 = vpack.c.b16 %v1585, %v1583
      %v1774 = vpack.c.b16 %v1586, %v1584
      %v1775 = vpack.c.b16 %v1589, %v1587
      %v1776 = vpack.c.b16 %v1590, %v1588
      %v1777 = vpack.c.b16 %v1593, %v1591
      %v1778 = vpack.c.b16 %v1594, %v1592
      %v1779 = vpack.c.b16 %v1597, %v1595
      %v1780 = vpack.c.b16 %v1598, %v1596
      %v1781 = vpack.c.b16 %v1601, %v1599
      %v1782 = vpack.c.b16 %v1602, %v1600
      %v1783 = vpack.c.b16 %v1605, %v1603
      %v1784 = vpack.c.b16 %v1606, %v1604
      %v1785 = vpack.c.b16 %v1609, %v1607
      %v1786 = vpack.c.b16 %v1610, %v1608
      %v1787 = vpack.c.b16 %v1613, %v1611
      %v1788 = vpack.c.b16 %v1614, %v1612
      %v1789 = vpack.c.b16 %v1617, %v1615
      %v1790 = vpack.c.b16 %v1618, %v1616
      %v1791 = vpack.c.b16 %v1621, %v1619
      %v1792 = vpack.c.b16 %v1622, %v1620
      %v1793 = vpack.c.b16 %v1625, %v1623
      %v1794 = vpack.c.b16 %v1626, %v1624
      %v1795 = vpack.c.b16 %v1629, %v1627
      %v1796 = vpack.c.b16 %v1630, %v1628
      %v1797 = vpack.c.b16 %v1633, %v1631
      %v1798 = vpack.c.b16 %v1634, %v1632
      %v1799 = vpack.c.b16 %v1637, %v1635
      %v1800 = vpack.c.b16 %v1638, %v1636
      %v1801 = vpack.c.b16 %v1641, %v1639
      %v1802 = vpack.c.b16 %v1642, %v1640
      %v1803 = vpack.c.b16 %v1645, %v1643
      %v1804 = vpack.c.b16 %v1646, %v1644
      %v1805 = vpack.c.b16 %v1649, %v1647
      %v1806 = vpack.c.b16 %v1650, %v1648
      %v1807 = vpack.c.b16 %v1653, %v1651
      %v1808 = vpack.c.b16 %v1654, %v1652
      %v1809 = vpack.c.b16 %v1657, %v1655
      %v1810 = vpack.c.b16 %v1658, %v1656
      %v1811 = vpack.c.b16 %v1661, %v1659
      %v1812 = vpack.c.b16 %v1662, %v1660
      %v1813 = vpack.c.b16 %v1665, %v1663
      %v1814 = vpack.c.b16 %v1666, %v1664
      %v1815 = vpack.c.b16 %v1669, %v1667
      %v1816 = vpack.c.b16 %v1670, %v1668
      %v1817 = vpack.c.b16 %v1673, %v1671
      %v1818 = vpack.c.b16 %v1674, %v1672
      %v1819 = vpack.c.b16 %v1677, %v1675
      %v1820 = vpack.c.b16 %v1678, %v1676
      %v1821 = vpack.c.b16 %v1681, %v1679
      %v1822 = vpack.c.b16 %v1682, %v1680
      %v1823 = vpack.c.b16 %v1685, %v1683
      %v1824 = vpack.c.b16 %v1686, %v1684
      %v1825 = vpack.c.b16 %v1689, %v1687
      %v1826 = vpack.c.b16 %v1690, %v1688
      %v1827 = vpack.c.b16 %v1693, %v1691
      %v1828 = vpack.c.b16 %v1694, %v1692
      %v1829 = vpack.c.b16 %v1697, %v1695
      %v1830 = vpack.c.b16 %v1698, %v1696
      %v1831 = vpack.c.b16 %v1701, %v1699
      %v1832 = vpack.c.b16 %v1702, %v1700
      %v1833 = vpack.c.b16 %v1705, %v1703
      %v1834 = vpack.c.b16 %v1706, %v1704
      %v1835 = vpack.c.b16 %v1709, %v1707
      %v1836 = vpack.c.b16 %v1710, %v1708
      %v1837 = vpack.c.b16 %v1713, %v1711
      %v1838 = vpack.c.b16 %v1714, %v1712
      %v1839 = vpack.c.b16 %v1717, %v1715
      %v1840 = vpack.c.b16 %v1718, %v1716
      %v1841 = vpack.c.b16 %v1721, %v1719
      %v1842 = vpack.c.b16 %v1722, %v1720
      %v1843 = vpack.c.b16 %v1725, %v1723
      %v1844 = vpack.c.b16 %v1726, %v1724
      %v1845 = vpack.c.b16 %v1729, %v1727
      %v1846 = vpack.c.b16 %v1730, %v1728
      %v1847 = vpack.c.b16 %v1733, %v1731
      %v1848 = vpack.c.b16 %v1734, %v1732
      %v1849 = vpack.c.b16 %v1737, %v1735
      %v1850 = vpack.c.b16 %v1738, %v1736
      %v1851 = vpack.c.b16 %v1741, %v1739
      %v1852 = vpack.c.b16 %v1742, %v1740
      %v1853 = vpack.c.b16 %v1745, %v1743
      %v1854 = vpack.c.b16 %v1746, %v1744
      %v1855 = vpack.c.b16 %v1749, %v1747
      %v1856 = vpack.c.b16 %v1750, %v1748
      %v1857 = vpack.c.b16 %v1753, %v1751
      %v1858 = vpack.c.b16 %v1754, %v1752
      %v1859 = vpack.c.b16 %v1757, %v1755
      %v1860 = vpack.c.b16 %v1758, %v1756
      %v1861 = vpack.c.b16 %v1761, %v1759
      %v1862 = vpack.c.b16 %v1762, %v1760
      %v1863 = vpack.c.b16 %v1765, %v1763
      %v1864 = vpack.c.b16 %v1766, %v1764
      %v1865 = vpack.c.b16 %v1769, %v1767
      %v1866 = vpack.c.b16 %v1770, %v1768
      %1963 = vmatprep.subr.bf16.mxu0 %v1786
      %1964 = vmatpush1.bf16.msra.mxu0 %v1785
      %1965 = vmatprep.subr.bf16.mxu0 %v1784
      %1966 = vmatpush1.bf16.msra.mxu0 %v1783
      %1967 = vmatprep.subr.bf16.mxu0 %v1782
      %1968 = vmatpush1.bf16.msra.mxu0 %v1781
      %1969 = vmatprep.subr.bf16.mxu0 %v1780
      %1970 = vmatpush1.bf16.msra.mxu0 %v1779
      %1971 = vmatprep.subr.bf16.mxu0 %v1778
      %1972 = vmatpush1.bf16.msra.mxu0 %v1777
      %1973 = vmatprep.subr.bf16.mxu0 %v1776
      %1974 = vmatpush1.bf16.msra.mxu0 %v1775
      %1975 = vmatprep.subr.bf16.mxu0 %v1774
      %1976 = vmatpush1.bf16.msra.mxu0 %v1773
      %1977 = vmatprep.subr.bf16.mxu0 %v1772
      %1978 = vmatpush1.bf16.msra.mxu0 %v1771
      %1979 = vmatprep.subr.bf16.mxu0 %v1802
      %1980 = vmatpush2.bf16.msra.mxu0 %v1801
      %1981 = vmatprep.subr.bf16.mxu0 %v1800
      %1982 = vmatpush2.bf16.msra.mxu0 %v1799
      %1983 = vmatprep.subr.bf16.mxu0 %v1798
      %1984 = vmatpush2.bf16.msra.mxu0 %v1797
      %1985 = vmatprep.subr.bf16.mxu0 %v1796
      %1986 = vmatpush2.bf16.msra.mxu0 %v1795
      %1987 = vmatprep.subr.bf16.mxu0 %v1794
      %1988 = vmatpush2.bf16.msra.mxu0 %v1793
      %1989 = vmatprep.subr.bf16.mxu0 %v1792
      %1990 = vmatpush2.bf16.msra.mxu0 %v1791
      %1991 = vmatprep.subr.bf16.mxu0 %v1790
      %1992 = vmatpush2.bf16.msra.mxu0 %v1789
      %1993 = vmatprep.subr.bf16.mxu0 %v1788
      %1994 = vmatpush2.bf16.msra.mxu0 %v1787
      %1995 = vmatprep.mubr.bf16.mxu0 %v1359
      %1996 = vmatmul.mubr.bf16.gmra.mxu0 %v1358
      %v1997 = vpop.f32.mrf.mxu0
      %v1998 = vadd.f32 %v1476, %v1997
      %v1999 = vpop.f32.mrf.mxu0
      %v2000 = vadd.f32 %v1480, %v1999
      %v2001 = vpop.f32.mrf.mxu0
      %v2002 = vadd.f32 %v1476, %v2001
      %v2003 = vpop.f32.mrf.mxu0
      %v2004 = vadd.f32 %v1480, %v2003
      %2005 = vdwg.mxu0
      %2006 = vmatprep.subr.bf16.mxu0 %v1818
      %2007 = vmatpush1.bf16.msra.mxu0 %v1817
      %2008 = vmatprep.subr.bf16.mxu0 %v1816
      %2009 = vmatpush1.bf16.msra.mxu0 %v1815
      %2010 = vmatprep.subr.bf16.mxu0 %v1814
      %2011 = vmatpush1.bf16.msra.mxu0 %v1813
      %2012 = vmatprep.subr.bf16.mxu0 %v1812
      %2013 = vmatpush1.bf16.msra.mxu0 %v1811
      %2014 = vmatprep.subr.bf16.mxu0 %v1810
      %2015 = vmatpush1.bf16.msra.mxu0 %v1809
      %2016 = vmatprep.subr.bf16.mxu0 %v1808
      %2017 = vmatpush1.bf16.msra.mxu0 %v1807
      %2018 = vmatprep.subr.bf16.mxu0 %v1806
      %2019 = vmatpush1.bf16.msra.mxu0 %v1805
      %2020 = vmatprep.subr.bf16.mxu0 %v1804
      %2021 = vmatpush1.bf16.msra.mxu0 %v1803
      %2022 = vmatprep.subr.bf16.mxu0 %v1834
      %2023 = vmatpush2.bf16.msra.mxu0 %v1833
      %2024 = vmatprep.subr.bf16.mxu0 %v1832
      %2025 = vmatpush2.bf16.msra.mxu0 %v1831
      %2026 = vmatprep.subr.bf16.mxu0 %v1830
      %2027 = vmatpush2.bf16.msra.mxu0 %v1829
      %2028 = vmatprep.subr.bf16.mxu0 %v1828
      %2029 = vmatpush2.bf16.msra.mxu0 %v1827
      %2030 = vmatprep.subr.bf16.mxu0 %v1826
      %2031 = vmatpush2.bf16.msra.mxu0 %v1825
      %2032 = vmatprep.subr.bf16.mxu0 %v1824
      %2033 = vmatpush2.bf16.msra.mxu0 %v1823
      %2034 = vmatprep.subr.bf16.mxu0 %v1822
      %2035 = vmatpush2.bf16.msra.mxu0 %v1821
      %2036 = vmatprep.subr.bf16.mxu0 %v1820
      %2037 = vmatpush2.bf16.msra.mxu0 %v1819
      %2038 = vmatprep.mubr.bf16.mxu0 %v1340
      %2039 = vmatmul.mubr.bf16.gmra.mxu0 %v1339
      %v2040 = vpop.f32.mrf.mxu0
      %v2041 = vadd.f32 %v1998, %v2040
      %v2042 = vpop.f32.mrf.mxu0
      %v2043 = vadd.f32 %v2000, %v2042
      %v2044 = vpop.f32.mrf.mxu0
      %v2045 = vadd.f32 %v2002, %v2044
      %v2046 = vpop.f32.mrf.mxu0
      %v2047 = vadd.f32 %v2004, %v2046
      %2048 = vdwg.mxu0
      %2049 = vmatprep.subr.bf16.mxu0 %v1850
      %2050 = vmatpush1.bf16.msra.mxu0 %v1849
      %2051 = vmatprep.subr.bf16.mxu0 %v1848
      %2052 = vmatpush1.bf16.msra.mxu0 %v1847
      %2053 = vmatprep.subr.bf16.mxu0 %v1846
      %2054 = vmatpush1.bf16.msra.mxu0 %v1845
      %2055 = vmatprep.subr.bf16.mxu0 %v1844
      %2056 = vmatpush1.bf16.msra.mxu0 %v1843
      %2057 = vmatprep.subr.bf16.mxu0 %v1842
      %2058 = vmatpush1.bf16.msra.mxu0 %v1841
      %2059 = vmatprep.subr.bf16.mxu0 %v1840
      %2060 = vmatpush1.bf16.msra.mxu0 %v1839
      %2061 = vmatprep.subr.bf16.mxu0 %v1838
      %2062 = vmatpush1.bf16.msra.mxu0 %v1837
      %2063 = vmatprep.subr.bf16.mxu0 %v1836
      %2064 = vmatpush1.bf16.msra.mxu0 %v1835
      %2065 = vmatprep.subr.bf16.mxu0 %v1866
      %2066 = vmatpush2.bf16.msra.mxu0 %v1865
      %2067 = vmatprep.subr.bf16.mxu0 %v1864
      %2068 = vmatpush2.bf16.msra.mxu0 %v1863
      %2069 = vmatprep.subr.bf16.mxu0 %v1862
      %2070 = vmatpush2.bf16.msra.mxu0 %v1861
      %2071 = vmatprep.subr.bf16.mxu0 %v1860
      %2072 = vmatpush2.bf16.msra.mxu0 %v1859
      %2073 = vmatprep.subr.bf16.mxu0 %v1858
      %2074 = vmatpush2.bf16.msra.mxu0 %v1857
      %2075 = vmatprep.subr.bf16.mxu0 %v1856
      %2076 = vmatpush2.bf16.msra.mxu0 %v1855
      %2077 = vmatprep.subr.bf16.mxu0 %v1854
      %2078 = vmatpush2.bf16.msra.mxu0 %v1853
      %2079 = vmatprep.subr.bf16.mxu0 %v1852
      %2080 = vmatpush2.bf16.msra.mxu0 %v1851
      %2081 = vmatprep.mubr.bf16.mxu0 %v1374
      %2082 = vmatmul.mubr.bf16.gmra.mxu0 %v1373
      %v2083 = vpop.f32.mrf.mxu0
      %v2084 = vadd.f32 %v2041, %v2083
      %v2085 = vpop.f32.mrf.mxu0
      %v2086 = vadd.f32 %v2043, %v2085
      %v2087 = vpop.f32.mrf.mxu0
      %v2088 = vadd.f32 %v2045, %v2087
      %v2089 = vpop.f32.mrf.mxu0
      %v2090 = vadd.f32 %v2047, %v2089
      %2091 = vdwg.mxu0
      %v2092 = vmax.f32 %v2084, 0.0
      %v2093 = vmax.f32 %v2086, 0.0
      %v2094 = vmax.f32 %v2088, 0.0
      %v2095 = vmax.f32 %v2090, 0.0
      %2096 = vst [vmem:[%s523] sm:$0xff] %v2092
      %2097 = vst [vmem:[%s523 + $0x8] sm:$0xff] %v2093
      %2098 = vst [vmem:[%s523 + $0x10] sm:$0xff] %v2094
      %2099 = vst [vmem:[%s523 + $0x18] sm:$0xff] %v2095
      %s2100 = smul.u32 2, %s26
      %p2101 = scmp.lt.s32.totalorder %s2100, 3
      %s2102 = scalar_select %p2101, %s2100, 3
      %s2103 = smul.addr %s2102, 2
      %s2104 = smul.addr %s2103, 8
      %s2105 = scalar_lea.vmem %s15, %s2104
      // Predicated region
      $region81: #{asym_bi_cha_fuse_reduce.1} parent=79 // pred_check
        %p2106 = pneg %p369
      $region82: #{asym_bi_cha_fuse_reduce.1} parent=79 // pred_check_branch
        %2108 = sbr.rel (%p2106) target = $region84
      $region83: #{asym_bi_cha_fuse_reduce.1} parent=79 // pred_region
        %s2109 = smul.u32 2, %s26
      $region84: #{asym_bi_cha_fuse_reduce.1} parent=79 // pred_fallthru
        _
    $region80: #{asym_bi_cha_fuse_reduce.1} parent=5 // pred_fallthru
      _
    %p2110 = scmp.le.s32.totalorder 2, %s21
    // Predicated region
    $region85: #{asym_bi_cha_fuse_reduce.1} parent=5 // pred_check
      %p2111 = pneg %p2110
    $region86: #{asym_bi_cha_fuse_reduce.1} parent=5 // pred_check_branch
      %2113 = sbr.rel (%p2111) target = $region88
    $region87: #{asym_bi_cha_fuse_reduce.1} parent=5 // pred_region
      %s2114 = ssub.s32 %s21, 2
      // Predicated region
      $region89: #{asym_bi_cha_fuse_reduce.1} parent=87 // pred_check
        %p2115 = pneg %p375
      $region90: #{asym_bi_cha_fuse_reduce.1} parent=87 // pred_check_branch
        %2117 = sbr.rel (%p2115) target = $region92
      $region91: #{asym_bi_cha_fuse_reduce.1} parent=87 // pred_region
        %s2118 = smul.u32 2, %s27
        %p2119 = scmp.lt.s32.totalorder %s2118, 3
        %s2120 = scalar_select %p2119, %s2118, 3
        %s2121 = smul.addr %s2120, 2
        %s2122 = smul.addr %s2121, 8
        %s2123 = scalar_lea.vmem %s15, %s2122
      $region92: #{asym_bi_cha_fuse_reduce.1} parent=87 // pred_fallthru
        _
    $region88: #{asym_bi_cha_fuse_reduce.1} parent=5 // pred_fallthru
      _
  $region6: #{asym_bi_cha_fuse_reduce.1} parent=0 // loop_footer
    %s25 = sadd.s32 1, %s21
  $region7: #{asym_bi_cha_fuse_reduce.1} parent=0 // loop_footer_branch
    %20 = sbr.rel target = $region3
  $region8: #{asym_bi_cha_fuse_reduce.1} parent=0 // loop_exit
    _

</llo_original>
